<compile_context>
chip_gen: v6e
topology: v6e:2x2x1
jax: 0.10.0
libtpu: 0.0.40
codegen_flags: <defaults>
</compile_context>

<pallas_src>
import functools
import math

import jax
import jax.numpy as jnp
from jax.experimental import pallas as pl
from jax.experimental.pallas import tpu as pltpu

EPS = 1e-5
_VMEM_LIMIT = 32 * 1024 * 1024  # stay inside v7x's 32 MiB scoped-VMEM default


def _round_up(x, m):
    return ((x + m - 1) // m) * m


# ----------------------------------------------------------------------------
# Pallas kernels
# ----------------------------------------------------------------------------
def _conv_stats_kernel(taps_ref, w_ref, y_ref, stats_ref):
    """Pass 1: one MXU matmul per M-tile + per-tile per-channel sum / sum-of-squares.

    taps_ref : (TM, Kp)    bf16  im2col rows (zero padded)
    w_ref    : (Kp, Cp)    bf16  flattened conv weights (zero padded)
    y_ref    : (TM, Cp)    bf16  conv output tile (f32 MXU accumulate, bf16 store)
    stats_ref: (1, 2, Cp)  f32   per-tile partials: row0 = sum, row1 = sum of squares
                                 (per-tile output keeps the grid axis 'parallel' so
                                  v7x can shard pass 1 across both TensorCores)
    """
    y = jnp.dot(taps_ref[...], w_ref[...], preferred_element_type=jnp.float32)
    y_ref[...] = y.astype(y_ref.dtype)
    s = jnp.sum(y, axis=0, keepdims=True)        # (1, Cp)
    ss = jnp.sum(y * y, axis=0, keepdims=True)   # (1, Cp)
    stats_ref[...] = jnp.concatenate([s, ss], axis=0)[None]


def _bn_apply_kernel(*refs, relu, res_mode):
    """Pass 2: y*scale + shift (+ residual | + fused BN(y_ds)) (+ ReLU). bf16 in/out."""
    y_ref, scale_ref, shift_ref = refs[:3]
    out_ref = refs[-1]
    y = y_ref[...].astype(jnp.float32) * scale_ref[...] + shift_ref[...]
    if res_mode == "plain":
        res_ref = refs[3]
        y = y + res_ref[...].astype(jnp.float32)
    elif res_mode == "fused_bn":
        yds_ref, sds_ref, hds_ref = refs[3:6]
        y = y + (yds_ref[...].astype(jnp.float32) * sds_ref[...] + hds_ref[...])
    if relu:
        y = jnp.maximum(y, 0.0)
    out_ref[...] = y.astype(out_ref.dtype)


# ----------------------------------------------------------------------------
# Pass 1: conv (im2col matmul) + batch statistics  ->  (y_pad, scale, shift, dims)
# ----------------------------------------------------------------------------
def _im2col(x_nhwc, KH, KW, stride, dilation, padding, Hout, Wout):
    # im2col glue: build the (M, KK*Cin) row matrix (single contiguous HBM array).
    # TODO(synk): a per-tile on-the-fly window gather (memory_space=pl.ANY + manual DMA)
    # would remove the KK-fold HBM expansion entirely; not implemented here.
    N, H, W, Cin = x_nhwc.shape
    xp = jnp.pad(x_nhwc, ((0, 0), (padding, padding), (padding, padding), (0, 0)))
    cols = []
    for kh in range(KH):
        for kw in range(KW):
            h0, w0 = kh * dilation, kw * dilation
            cols.append(
                xp[:, h0:h0 + (Hout - 1) * stride + 1:stride,
                      w0:w0 + (Wout - 1) * stride + 1:stride, :])
    return jnp.concatenate(cols, axis=-1).reshape(N * Hout * Wout, KH * KW * Cin)


def conv_bn_stats(x_nhwc, w, gamma, beta, *, stride, dilation, padding, tm=1024):
    N, H, W, Cin = x_nhwc.shape
    KH, KW, _, Cout = w.shape
    Hout = (H + 2 * padding - dilation * (KH - 1) - 1) // stride + 1
    Wout = (W + 2 * padding - dilation * (KW - 1) - 1) // stride + 1
    M = N * Hout * Wout
    K = KH * KW * Cin
    Kp = _round_up(K, 128)        # lane-dense contraction dim
    Cp = _round_up(Cout, 128)     # lane-dense output dim (unmasked stores)
    TM = min(tm, _round_up(M, 8))
    M_pad = _round_up(M, TM)
    grid = M_pad // TM

    taps = _im2col(x_nhwc, KH, KW, stride, dilation, padding, Hout, Wout)
    taps = jnp.pad(taps, ((0, M_pad - M), (0, Kp - K))).astype(jnp.bfloat16)
    wk = jnp.pad(w.reshape(K, Cout),
                 ((0, Kp - K), (0, Cp - Cout))).astype(jnp.bfloat16)

    y, stats = pl.pallas_call(
        _conv_stats_kernel,
        out_shape=(jax.ShapeDtypeStruct((M_pad, Cp), jnp.bfloat16),
                   jax.ShapeDtypeStruct((grid, 2, Cp), jnp.float32)),
        grid=(grid,),
        in_specs=[pl.BlockSpec((TM, Kp), lambda i: (i, 0)),
                  pl.BlockSpec((Kp, Cp), lambda i: (0, 0))],
        out_specs=(pl.BlockSpec((TM, Cp), lambda i: (i, 0)),
                   pl.BlockSpec((1, 2, Cp), lambda i: (i, 0, 0))),
        compiler_params=pltpu.CompilerParams(
            dimension_semantics=("parallel",),   # per-tile stats -> megacore-shardable
            vmem_limit_bytes=_VMEM_LIMIT),
        cost_estimate=pl.CostEstimate(
            flops=2 * M_pad * Kp * Cp, transcendentals=0,
            bytes_accessed=(M_pad * Kp * 2 + Kp * Cp * 2 + M_pad * Cp * 2
                            + grid * 2 * Cp * 4)),
    )(taps, wk)

    # Batch statistics over the *true* M rows (padded rows/channels contribute 0).
    totals = jnp.sum(stats, axis=0)               # (2, Cp)
    mean = totals[0] / M
    var = totals[1] / M - mean * mean             # E[x^2] - E[x]^2 (biased, like PyTorch)
    inv = jax.lax.rsqrt(var + EPS)
    gamma_p = jnp.pad(gamma, (0, Cp - Cout))
    beta_p = jnp.pad(beta, (0, Cp - Cout))
    scale = (gamma_p * inv).reshape(1, Cp)
    shift = (beta_p - mean * gamma_p * inv).reshape(1, Cp)

    dims = dict(N=N, Hout=Hout, Wout=Wout, Cout=Cout,
                M=M, M_pad=M_pad, Cp=Cp, TM=TM, grid=grid)
    return y, scale, shift, dims


# ----------------------------------------------------------------------------
# Pass 2: BN apply (+ residual / fused downsample BN) (+ ReLU)
# ----------------------------------------------------------------------------
def bn_apply(y, scale, shift, dims, *, relu, residual=None, residual_bn=None):
    M_pad, Cp, TM, grid = dims["M_pad"], dims["Cp"], dims["TM"], dims["grid"]

    inputs = [y, scale, shift]
    in_specs = [pl.BlockSpec((TM, Cp), lambda i: (i, 0)),
                pl.BlockSpec((1, Cp), lambda i: (0, 0)),
                pl.BlockSpec((1, Cp), lambda i: (0, 0))]
    if residual_bn is not None:
        res_mode = "fused_bn"
        y_ds, s_ds, h_ds = residual_bn
        inputs += [y_ds, s_ds, h_ds]
        in_specs += [pl.BlockSpec((TM, Cp), lambda i: (i, 0)),
                     pl.BlockSpec((1, Cp), lambda i: (0, 0)),
                     pl.BlockSpec((1, Cp), lambda i: (0, 0))]
        n_big = 3
    elif residual is not None:
        res_mode = "plain"
        inputs.append(residual)
        in_specs.append(pl.BlockSpec((TM, Cp), lambda i: (i, 0)))
        n_big = 3
    else:
        res_mode = "none"
        n_big = 2

    out = pl.pallas_call(
        functools.partial(_bn_apply_kernel, relu=relu, res_mode=res_mode),
        out_shape=jax.ShapeDtypeStruct((M_pad, Cp), jnp.bfloat16),
        grid=(grid,),
        in_specs=in_specs,
        out_specs=pl.BlockSpec((TM, Cp), lambda i: (i, 0)),
        compiler_params=pltpu.CompilerParams(
            dimension_semantics=("parallel",),
            vmem_limit_bytes=_VMEM_LIMIT),
        cost_estimate=pl.CostEstimate(
            flops=5 * M_pad * Cp, transcendentals=0,
            bytes_accessed=(n_big + 1) * M_pad * Cp * 2 + 4 * Cp * 4),
    )(*inputs)
    return out  # padded (M_pad, Cp) bf16


# ----------------------------------------------------------------------------
# BasicBlock forward (matches the PyTorch module, fresh .train() BatchNorm)
# ----------------------------------------------------------------------------
def basic_block_forward(params, x_nchw):
    x = jnp.transpose(x_nchw, (0, 2, 3, 1)).astype(jnp.bfloat16)   # NCHW -> NHWC, bf16
    c1, c2 = params["conv1"], params["conv2"]

    # conv1 -> bn1 -> relu
    y1, s1, h1_, d1 = conv_bn_stats(x, c1["w"], c1["gamma"], c1["beta"],
                                    stride=c1["stride"], dilation=c1["dilation"],
                                    padding=c1["padding"])
    a1 = bn_apply(y1, s1, h1_, d1, relu=True)
    a1_nhwc = a1[:d1["M"], :d1["Cout"]].reshape(
        d1["N"], d1["Hout"], d1["Wout"], d1["Cout"])

    # conv2 pass 1 (stats); its BN-apply is fused with the residual below
    y2, s2, h2_, d2 = conv_bn_stats(a1_nhwc, c2["w"], c2["gamma"], c2["beta"],
                                    stride=1, dilation=c2["dilation"],
                                    padding=c2["padding"])

    residual = None
    residual_bn = None
    if params["residual"]:
        if params["downsample"] is not None:
            ds = params["downsample"]
            # downsample conv pass 1 only; its BN-apply is fused into conv2's pass 2
            y_ds, s_ds, h_ds, d_ds = conv_bn_stats(
                x, ds["w"], ds["gamma"], ds["beta"], stride=ds["stride"],
                dilation=1, padding=0, tm=d2["TM"])
            assert d_ds["M_pad"] == d2["M_pad"] and d_ds["Cp"] == d2["Cp"]
            residual_bn = (y_ds, s_ds, h_ds)
        else:
            # identity residual, padded to conv2's lane-dense (M_pad, Cp) layout
            Cin = x.shape[-1]
            r = x.reshape(d2["M"], Cin)
            residual = jnp.pad(
                r, ((0, d2["M_pad"] - d2["M"]), (0, d2["Cp"] - Cin)))

    out2 = bn_apply(y2, s2, h2_, d2, relu=True,
                    residual=residual, residual_bn=residual_bn)
    out = out2[:d2["M"], :d2["Cout"]].reshape(
        d2["N"], d2["Hout"], d2["Wout"], d2["Cout"]).astype(jnp.float32)
    return jnp.transpose(out, (0, 3, 1, 2))                        # NHWC -> NCHW


# ----------------------------------------------------------------------------
# Plain-JAX f32 reference (for a loose numerical sanity check)
# ----------------------------------------------------------------------------
def _ref_conv_bn(x, w, gamma, beta, *, stride, dilation, padding, relu, residual=None):
    y = jax.lax.conv_general_dilated(
        x, w, window_strides=(stride, stride),
        padding=((padding, padding), (padding, padding)),
        rhs_dilation=(dilation, dilation),
        dimension_numbers=("NHWC", "HWIO", "NHWC"))
    mean = jnp.mean(y, axis=(0, 1, 2))
    var = jnp.mean((y - mean) ** 2, axis=(0, 1, 2))
    y = (y - mean) * jax.lax.rsqrt(var + EPS) * gamma + beta
    if residual is not None:
        y = y + residual
    if relu:
        y = jnp.maximum(y, 0.0)
    return y


def basic_block_reference(params, x_nchw):
    x = jnp.transpose(x_nchw, (0, 2, 3, 1)).astype(jnp.float32)
    c1, c2 = params["conv1"], params["conv2"]
    out = _ref_conv_bn(x, c1["w"], c1["gamma"], c1["beta"], stride=c1["stride"],
                       dilation=c1["dilation"], padding=c1["padding"], relu=True)
    if params["downsample"] is not None:
        ds = params["downsample"]
        identity = _ref_conv_bn(x, ds["w"], ds["gamma"], ds["beta"], stride=ds["stride"],
                                dilation=1, padding=0, relu=False)
    else:
        identity = x
    res = identity if params["residual"] else None
    out = _ref_conv_bn(out, c2["w"], c2["gamma"], c2["beta"], stride=1,
                       dilation=c2["dilation"], padding=c2["padding"], relu=True,
                       residual=res)
    return jnp.transpose(out, (0, 3, 1, 2))


# ----------------------------------------------------------------------------
if __name__ == "__main__":
    key = jax.random.PRNGKey(0)
    kx, k1, k2, k3, kx2, k4, k5 = jax.random.split(key, 7)

    def conv_w(k, kh, kw, cin, cout):
        n = kh * kw * cout
        return jax.random.normal(k, (kh, kw, cin, cout), jnp.float32) * math.sqrt(2.0 / n)

    def check(params, x):
        out = jax.block_until_ready(basic_block_forward(params, x))
        ref = jax.block_until_ready(basic_block_reference(params, x))
        assert out.shape == ref.shape, (out.shape, ref.shape)
        assert bool(jnp.all(jnp.isfinite(out)))
        rel_err = float(jnp.max(jnp.abs(out - ref) / (jnp.abs(ref) + 1.0)))
        assert rel_err < 0.1, f"relative error vs reference = {rel_err}"
        return out

    # Config A: inplanes=16 -> planes=32 with a 1x1 downsample conv+BN (exercises the
    # fused downsample-BN residual path), stride=1, dilation=(1,1), residual=True.
    N, inplanes, H, W = 2, 16, 32, 32
    planes = 32
    params_a = dict(
        conv1=dict(w=conv_w(k1, 3, 3, inplanes, planes),
                   gamma=jnp.ones((planes,), jnp.float32),
                   beta=jnp.zeros((planes,), jnp.float32),
                   stride=1, padding=1, dilation=1),
        conv2=dict(w=conv_w(k2, 3, 3, planes, planes),
                   gamma=jnp.ones((planes,), jnp.float32),
                   beta=jnp.zeros((planes,), jnp.float32),
                   padding=1, dilation=1),
        downsample=dict(w=conv_w(k3, 1, 1, inplanes, planes),
                        gamma=jnp.ones((planes,), jnp.float32),
                        beta=jnp.zeros((planes,), jnp.float32),
                        stride=1),
        residual=True,
    )
    x_a = jax.random.normal(kx, (N, inplanes, H, W), jnp.float32)
    out_a = check(params_a, x_a)
    assert out_a.shape == (N, planes, H, W)

    # Config B: inplanes == planes == 32, no downsample (identity residual path).
    planes_b = 32
    params_b = dict(
        conv1=dict(w=conv_w(k4, 3, 3, planes_b, planes_b),
                   gamma=jnp.ones((planes_b,), jnp.float32),
                   beta=jnp.zeros((planes_b,), jnp.float32),
                   stride=1, padding=1, dilation=1),
        conv2=dict(w=conv_w(k5, 3, 3, planes_b, planes_b),
                   gamma=jnp.ones((planes_b,), jnp.float32),
                   beta=jnp.zeros((planes_b,), jnp.float32),
                   padding=1, dilation=1),
        downsample=None,
        residual=True,
    )
    x_b = jax.random.normal(kx2, (2, planes_b, 16, 16), jnp.float32)
    out_b = check(params_b, x_b)
    assert out_b.shape == (2, planes_b, 16, 16)

    print("KERNEL_OK")
</pallas_src>

<mosaic_0001>
module attributes {stable_mosaic.version = 11 : i64} {
  func.func @_conv_stats_kernel(%arg0: i32, %arg1: memref<1024x256xbf16, #tpu.memory_space<vmem>>, %arg2: memref<256x128xbf16, #tpu.memory_space<vmem>>, %arg3: memref<1024x128xbf16, #tpu.memory_space<vmem>>, %arg4: memref<1x2x128xf32, #tpu.memory_space<vmem>>) attributes {dimension_semantics = [#tpu.dimension_semantics<parallel>], iteration_bounds = array<i64: 2>, scalar_prefetch = 0 : i64, scratch_operands = 0 : i64, tpu.core_type = #tpu.core_type<tc>, window_params = [{transform_indices = @transform_0, window_bounds = array<i64: 1024, 256>}, {pipeline_mode = #tpu.pipeline_mode<synchronous>, transform_indices = @transform_1, window_bounds = array<i64: 256, 128>}, {transform_indices = @transform_2, window_bounds = array<i64: 1024, 128>}, {transform_indices = @transform_3, window_bounds = array<i64: 1, 2, 128>}]} {
    %c0 = arith.constant 0 : index
    %c0_0 = arith.constant 0 : index
    %0 = vector.load %arg1[%c0, %c0_0] : memref<1024x256xbf16, #tpu.memory_space<vmem>>, vector<1024x256xbf16>
    %c0_1 = arith.constant 0 : index
    %c0_2 = arith.constant 0 : index
    %1 = vector.load %arg2[%c0_1, %c0_2] : memref<256x128xbf16, #tpu.memory_space<vmem>>, vector<256x128xbf16>
    %cst = arith.constant dense<0.000000e+00> : vector<1024x128xf32>
    %2 = tpu.matmul %0, %1, %cst {dimension_numbers = #tpu.dot_dimension_numbers<[1], [0], [0], [1], [0, 0, 1, 1], [], []>} : vector<1024x256xbf16>, vector<256x128xbf16>, vector<1024x128xf32> -> vector<1024x128xf32>
    %3 = arith.truncf %2 : vector<1024x128xf32> to vector<1024x128xbf16>
    %c0_3 = arith.constant 0 : index
    %c0_4 = arith.constant 0 : index
    %4 = vector.load %arg3[%c0_3, %c0_4] : memref<1024x128xbf16, #tpu.memory_space<vmem>>, vector<1024x128xbf16>
    tpu.vector_store %arg3[%c0_3, %c0_4], %3 {strides = array<i32>} : memref<1024x128xbf16, #tpu.memory_space<vmem>>, vector<1024x128xbf16>,
    %cst_5 = arith.constant dense<0.000000e+00> : vector<128xf32>
    %5 = vector.multi_reduction <add>, %2, %cst_5 [0] : vector<1024x128xf32> to vector<128xf32>
    %6 = vector.shape_cast %5 : vector<128xf32> to vector<1x128xf32>
    %7 = arith.mulf %2, %2 : vector<1024x128xf32>
    %cst_6 = arith.constant dense<0.000000e+00> : vector<128xf32>
    %8 = vector.multi_reduction <add>, %7, %cst_6 [0] : vector<1024x128xf32> to vector<128xf32>
    %9 = vector.shape_cast %8 : vector<128xf32> to vector<1x128xf32>
    %10 = tpu.concatenate %6, %9 in 0 : vector<1x128xf32>, vector<1x128xf32> -> vector<2x128xf32>
    %11 = vector.shape_cast %10 : vector<2x128xf32> to vector<1x2x128xf32>
    %c0_7 = arith.constant 0 : index
    %c0_8 = arith.constant 0 : index
    %c0_9 = arith.constant 0 : index
    %12 = vector.load %arg4[%c0_7, %c0_8, %c0_9] : memref<1x2x128xf32, #tpu.memory_space<vmem>>, vector<1x2x128xf32>
    tpu.vector_store %arg4[%c0_7, %c0_8, %c0_9], %11 {strides = array<i32>} : memref<1x2x128xf32, #tpu.memory_space<vmem>>, vector<1x2x128xf32>,
    return
  }
  func.func @transform_0(%arg0: i32) -> (i32, i32) {
    %c0_i32 = arith.constant 0 : i32
    %c0_i32_0 = arith.constant 0 : i32
    return %arg0, %c0_i32 : i32, i32
  }
  func.func @transform_1(%arg0: i32) -> (i32, i32) {
    %c0_i32 = arith.constant 0 : i32
    %c0_i32_0 = arith.constant 0 : i32
    %c0_i32_1 = arith.constant 0 : i32
    return %c0_i32, %c0_i32_0 : i32, i32
  }
  func.func @transform_2(%arg0: i32) -> (i32, i32) {
    %c0_i32 = arith.constant 0 : i32
    %c0_i32_0 = arith.constant 0 : i32
    return %arg0, %c0_i32 : i32, i32
  }
  func.func @transform_3(%arg0: i32) -> (i32, i32, i32) {
    %c0_i32 = arith.constant 0 : i32
    %c0_i32_0 = arith.constant 0 : i32
    %c0_i32_1 = arith.constant 0 : i32
    return %arg0, %c0_i32, %c0_i32_0 : i32, i32, i32
  }
}

</mosaic_0001>

<llo_original>
// kernel: tpu_custom_call.1
$region0: #{tpu_custom_call.1}
  #allocation0 [shape = 'u32[]', space=smem, size = 0x4, offset = 0x4, fixed_abs, tag = 'smem constant byte address 0x4 - core index']
  #allocation1 [shape = 'u32[144,128]{1,0:T(1,128)}', space=vmem, size = 0x12000, scoped, tag = 'internal scratch']
  %s0 = inlined_call_operand.hbm [shape: bf16[2048,256], index: 0, kind: input, shape index: {}]
  %s1 = inlined_call_operand.hbm [shape: bf16[256,128], index: 1, kind: input, shape index: {}]
  %s2 = inlined_call_operand.hbm [shape: bf16[2048,128], index: 2, kind: output, shape index: {0}]
  %s3 = inlined_call_operand.hbm [shape: f32[2,2,128], index: 3, kind: output, shape index: {1}]
  %4 = xla_tuple %s2, %s3
  %s5 = sld [smem:[#allocation0]]
  $region57: #{tpu_custom_call.1} parent=0
    _
  %s7 = ssub.s32 1, %s5
  %s8 = scalar_select 0, %s7, %s5
  $region1: #{tpu_custom_call.1} parent=0
    #allocation2 [shape = 'u8[1048576]{0}', space=vmem, size = 0x100000, scoped, tag = 'input window, operand 0']
    #allocation3 [shape = 's32[2]{0}', space=sflag, size = 0x8, scoped, tag = 'scoped memory for tpu_custom_call.1']
    #allocation4 [shape = 's32[2]{0}', space=sflag, size = 0x8, scoped, tag = 'scoped memory for tpu_custom_call.1']
    #allocation5 [shape = 'u8[65536]{0}', space=vmem, size = 0x10000, scoped, tag = 'input window, operand 1, single buffered']
    #allocation6 [shape = 's32[1]{0}', space=sflag, size = 0x4, scoped, tag = 'scoped memory for tpu_custom_call.1']
    #allocation7 [shape = 'u8[524288]{0}', space=vmem, size = 0x80000, scoped, tag = 'output window, operand 0']
    #allocation8 [shape = 'u8[2048]{0}', space=vmem, size = 0x800, scoped, tag = 'output window, operand 1']
    #allocation9 [shape = 's32[2]{0}', space=sflag, size = 0x8, scoped, tag = 'scoped memory for tpu_custom_call.1']
    %9 = vsyncpa [#allocation3], 0
    %s10 = scalar_lea.sflag [#allocation3], 1
    %11 = vsyncpa %s10, 0
    %12 = vsyncpa [#allocation6], 0
    %13 = vsyncpa [#allocation4], 0
    %s14 = scalar_lea.sflag [#allocation4], 1
    %15 = vsyncpa %s14, 0
    %16 = vsyncpa [#allocation9], 0
    %s17 = scalar_lea.sflag [#allocation9], 1
    %18 = vsyncpa %s17, 0
    loop: start=0, step=1, limit=4
    $region2: #{tpu_custom_call.1} parent=1 // loop_pre_header
      _
    $region3: #{tpu_custom_call.1} parent=1 // loop_header
      %s20 = sphi 0, %s24
      %p21 = scmp.ge.s32.totalorder %s20, 4
      %s30 = sphi 0, %s32
      %s33 = sphi 0, %s30
      %s34 = sphi 0, %s33
      %s50 = sphi 0, %s34
      %s54 = sphi 0, %s54
      %s56 = sphi 0, %s54
      %s57 = sphi 0, %s56
      %s71 = sphi 0, %s57
      %s77 = sphi 0, %s79
      %s80 = sphi 0, %s77
      %s81 = sphi 0, %s80
      %s97 = sphi 0, %s81
      %s103 = sphi 0, %s105
      %s106 = sphi 0, %s103
      %s107 = sphi 0, %s106
      %s123 = sphi 0, %s107
    $region4: #{tpu_custom_call.1} parent=1 // loop_header_branch
      %23 = sbr.rel (%p21) target = $region8
    $region5: #{tpu_custom_call.1} parent=1 // loop_body
      %s25 = ssub.s32 %s20, 1
      %s26 = ssub.s32 %s20, 2
      %s27 = sadd.s32 %s20, 1
      %s28 = ssub.s32 %s20, %s27
      %p29 = scmp.eq.s32.totalorder %s28, 0
      %s31 = sadd.s32 %s30, 1
      %s32 = scalar_select %p29, %s30, %s31
      %p35 = pneg %p29
      %p36 = scmp.eq.s32.totalorder %s20, 1
      %p37 = por %p35, %p36
      %p38 = scmp.ne.s32.totalorder %s30, %s33
      %p39 = scmp.eq.s32.totalorder %s20, 0
      %p40 = por %p38, %p39
      %p41 = scmp.ne.s32.totalorder %s30, %s33
      %p42 = scmp.eq.s32.totalorder %s25, 1
      %p43 = por %p41, %p42
      %p44 = scmp.ne.s32.totalorder %s33, %s34
      %p45 = scmp.eq.s32.totalorder %s25, 0
      %p46 = por %p44, %p45
      %p47 = scmp.ne.s32.totalorder %s33, %s34
      %p48 = scmp.eq.s32.totalorder %s26, 1
      %p49 = por %p47, %p48
      %p51 = scmp.ne.s32.totalorder %s34, %s50
      %p52 = scmp.eq.s32.totalorder %s26, 0
      %p53 = por %p51, %p52
      %s55 = sadd.s32 %s54, 1
      %p58 = scmp.eq.s32.totalorder %s20, 1
      %p59 = scmp.ne.s32.totalorder %s54, %s56
      %p60 = scmp.eq.s32.totalorder %s20, 0
      %p61 = por %p59, %p60
      %p62 = scmp.ne.s32.totalorder %s54, %s56
      %p63 = scmp.eq.s32.totalorder %s25, 1
      %p64 = por %p62, %p63
      %p65 = scmp.ne.s32.totalorder %s56, %s57
      %p66 = scmp.eq.s32.totalorder %s25, 0
      %p67 = por %p65, %p66
      %p68 = scmp.ne.s32.totalorder %s56, %s57
      %p69 = scmp.eq.s32.totalorder %s26, 1
      %p70 = por %p68, %p69
      %p72 = scmp.ne.s32.totalorder %s57, %s71
      %p73 = scmp.eq.s32.totalorder %s26, 0
      %p74 = por %p72, %p73
      %s75 = ssub.s32 %s20, %s27
      %p76 = scmp.eq.s32.totalorder %s75, 0
      %s78 = sadd.s32 %s77, 1
      %s79 = scalar_select %p76, %s77, %s78
      %p82 = pneg %p76
      %p83 = scmp.eq.s32.totalorder %s20, 1
      %p84 = por %p82, %p83
      %p85 = scmp.ne.s32.totalorder %s77, %s80
      %p86 = scmp.eq.s32.totalorder %s20, 0
      %p87 = por %p85, %p86
      %p88 = scmp.ne.s32.totalorder %s77, %s80
      %p89 = scmp.eq.s32.totalorder %s25, 1
      %p90 = por %p88, %p89
      %p91 = scmp.ne.s32.totalorder %s80, %s81
      %p92 = scmp.eq.s32.totalorder %s25, 0
      %p93 = por %p91, %p92
      %p94 = scmp.ne.s32.totalorder %s80, %s81
      %p95 = scmp.eq.s32.totalorder %s26, 1
      %p96 = por %p94, %p95
      %p98 = scmp.ne.s32.totalorder %s81, %s97
      %p99 = scmp.eq.s32.totalorder %s26, 0
      %p100 = por %p98, %p99
      %s101 = ssub.s32 %s20, %s27
      %p102 = scmp.eq.s32.totalorder %s101, 0
      %s104 = sadd.s32 %s103, 1
      %s105 = scalar_select %p102, %s103, %s104
      %p108 = pneg %p102
      %p109 = scmp.eq.s32.totalorder %s20, 1
      %p110 = por %p108, %p109
      %p111 = scmp.ne.s32.totalorder %s103, %s106
      %p112 = scmp.eq.s32.totalorder %s20, 0
      %p113 = por %p111, %p112
      %p114 = scmp.ne.s32.totalorder %s103, %s106
      %p115 = scmp.eq.s32.totalorder %s25, 1
      %p116 = por %p114, %p115
      %p117 = scmp.ne.s32.totalorder %s106, %s107
      %p118 = scmp.eq.s32.totalorder %s25, 0
      %p119 = por %p117, %p118
      %p120 = scmp.ne.s32.totalorder %s106, %s107
      %p121 = scmp.eq.s32.totalorder %s26, 1
      %p122 = por %p120, %p121
      %p124 = scmp.ne.s32.totalorder %s107, %s123
      %p125 = scmp.eq.s32.totalorder %s26, 0
      %p126 = por %p124, %p125
      %p127 = scmp.le.s32.totalorder 1, %s20
      %p128 = scmp.lt.s32.totalorder %s20, 3
      %p129 = pnand %p127, %p128
      %p130 = pneg %p129
      // Predicated region
      $region9: #{tpu_custom_call.1} parent=5 // pred_check
        _
      $region10: #{tpu_custom_call.1} parent=5 // pred_check_branch
        %132 = sbr.rel (%p129) target = $region12
      $region11: #{tpu_custom_call.1} parent=5 // pred_region
        %s133 = ssub.s32 %s20, 1
        // Predicated region
        $region13: #{tpu_custom_call.1} parent=11 // pred_check
          %p134 = pneg %p67
        $region14: #{tpu_custom_call.1} parent=11 // pred_check_branch
          %136 = sbr.rel (%p134) target = $region16
        $region15: #{tpu_custom_call.1} parent=11 // pred_region
          %s138 = ssub.s32 2048, 2048
          %139 = vsyncadd [#allocation6], %s138
          %s140 = sshll.u32 [#allocation5], 4
          %s141 = int_to_ptr.vmem [resolvable:$true] %s140
          %146 = dma.hbm_to_vmem [thread:$0]  %s1, 2048, %s141, [#allocation6], 64, 64, 4
        $region16: #{tpu_custom_call.1} parent=11 // pred_fallthru
          _
      $region12: #{tpu_custom_call.1} parent=5 // pred_fallthru
        _
      %p147 = scmp.lt.s32.totalorder %s20, 2
      // Predicated region
      $region17: #{tpu_custom_call.1} parent=5 // pred_check
        %p148 = pneg %p147
      $region18: #{tpu_custom_call.1} parent=5 // pred_check_branch
        %150 = sbr.rel (%p148) target = $region20
      $region19: #{tpu_custom_call.1} parent=5 // pred_region
        // Predicated region
        $region21: #{tpu_custom_call.1} parent=19 // pred_check
          %p151 = pneg %p40
        $region22: #{tpu_custom_call.1} parent=19 // pred_check_branch
          %153 = sbr.rel (%p151) target = $region24
        $region23: #{tpu_custom_call.1} parent=19 // pred_region
          %s154 = sand.u32 %s30, 1
          %s155 = scalar_lea.sflag [#allocation3], %s154
          %s156 = sand.u32 %s30, 1
          %s157 = smul.addr %s156, 1024
          %s158 = scalar_lea.vmem [#allocation2], %s157
          %s159 = smul.u32 128, %s20
          %s161 = ssub.s32 16384, 16384
          %162 = vsyncadd %s155, %s161
          %s163 = smul.addr %s159, 2
          %s164 = smul.addr %s163, 64
          %s165 = scalar_lea.hbm %s0, %s164
          %s166 = sshll.u32 %s158, 4
          %s167 = int_to_ptr.vmem [resolvable:$true] %s166
          %172 = dma.hbm_to_vmem [thread:$0]  %s165, 16384, %s167, %s155, 128, 128, 8
        $region24: #{tpu_custom_call.1} parent=19 // pred_fallthru
          _
      $region20: #{tpu_custom_call.1} parent=5 // pred_fallthru
        _
      %p173 = scmp.le.s32.totalorder 1, %s20
      %p174 = scmp.lt.s32.totalorder %s20, 3
      %p175 = pnand %p173, %p174
      %p176 = pneg %p175
      // Predicated region
      $region25: #{tpu_custom_call.1} parent=5 // pred_check
        _
      $region26: #{tpu_custom_call.1} parent=5 // pred_check_branch
        %178 = sbr.rel (%p175) target = $region28
      $region27: #{tpu_custom_call.1} parent=5 // pred_region
        %s179 = ssub.s32 %s20, 1
        %s180 = sand.u32 %s33, 1
        %s181 = scalar_lea.sflag [#allocation3], %s180
        %s182 = sand.u32 %s33, 1
        %s183 = smul.addr %s182, 1024
        %s184 = scalar_lea.vmem [#allocation2], %s183
        // Predicated region
        $region29: #{tpu_custom_call.1} parent=27 // pred_check
          %p185 = pneg %p46
        $region30: #{tpu_custom_call.1} parent=27 // pred_check_branch
          %187 = sbr.rel (%p185) target = $region32
        $region31: #{tpu_custom_call.1} parent=27 // pred_region
          %188 = dma.done %s181, 16384
        $region32: #{tpu_custom_call.1} parent=27 // pred_fallthru
          _
        // Predicated region
        $region33: #{tpu_custom_call.1} parent=27 // pred_check
          %p189 = pneg %p67
        $region34: #{tpu_custom_call.1} parent=27 // pred_check_branch
          %191 = sbr.rel (%p189) target = $region36
        $region35: #{tpu_custom_call.1} parent=27 // pred_region
          %192 = dma.done [#allocation6], 2048
        $region36: #{tpu_custom_call.1} parent=27 // pred_fallthru
          _
        %s193 = sand.u32 %s33, 1
        %s194 = scalar_lea.sflag [#allocation3], %s193
        %s195 = sand.u32 %s33, 1
        %s196 = smul.addr %s195, 1024
        %s197 = scalar_lea.vmem [#allocation2], %s196
        %p198 = pneg %p46
        %p199 = pneg %p43
        %p200 = pneg %p67
        %p201 = pneg %p64
        %p202 = pneg %p93
        %p203 = pneg %p90
        %s204 = sand.u32 %s80, 1
        %s205 = scalar_lea.sflag [#allocation4], %s204
        %s206 = sand.u32 %s80, 1
        %s207 = smul.addr %s206, 512
        %s208 = scalar_lea.vmem [#allocation7], %s207
        %p209 = pneg %p119
        %p210 = pneg %p116
        %s211 = sand.u32 %s106, 1
        %s212 = scalar_lea.sflag [#allocation9], %s211
        %s213 = sand.u32 %s106, 1
        %s214 = smul.addr %s213, 2
        %s215 = scalar_lea.vmem [#allocation8], %s214
        %s216 = smul.u32 128, %s25
        %s217 = smul.u32 128, %s25
        %v219 = vld [vmem:[%s184] sm:$0xff]
        %v220 = vld [vmem:[%s184 + $0x8] sm:$0xff]
        %v221 = vld [vmem:[%s184 + $0x10] sm:$0xff]
        %v222 = vld [vmem:[%s184 + $0x18] sm:$0xff]
        %v223 = vld [vmem:[%s184 + $0x20] sm:$0xff]
        %v224 = vld [vmem:[%s184 + $0x28] sm:$0xff]
        %v225 = vld [vmem:[%s184 + $0x30] sm:$0xff]
        %v226 = vld [vmem:[%s184 + $0x38] sm:$0xff]
        %v227 = vld [vmem:[%s184 + $0x40] sm:$0xff]
        %v228 = vld [vmem:[%s184 + $0x48] sm:$0xff]
        %v229 = vld [vmem:[%s184 + $0x50] sm:$0xff]
        %v230 = vld [vmem:[%s184 + $0x58] sm:$0xff]
        %v231 = vld [vmem:[%s184 + $0x60] sm:$0xff]
        %v232 = vld [vmem:[%s184 + $0x68] sm:$0xff]
        %v233 = vld [vmem:[%s184 + $0x70] sm:$0xff]
        %v234 = vld [vmem:[%s184 + $0x78] sm:$0xff]
        %v235 = vld [vmem:[%s184 + $0x80] sm:$0xff]
        %v236 = vld [vmem:[%s184 + $0x88] sm:$0xff]
        %v237 = vld [vmem:[%s184 + $0x90] sm:$0xff]
        %v238 = vld [vmem:[%s184 + $0x98] sm:$0xff]
        %v239 = vld [vmem:[%s184 + $0xa0] sm:$0xff]
        %v240 = vld [vmem:[%s184 + $0xa8] sm:$0xff]
        %v241 = vld [vmem:[%s184 + $0xb0] sm:$0xff]
        %v242 = vld [vmem:[%s184 + $0xb8] sm:$0xff]
        %v243 = vld [vmem:[%s184 + $0xc0] sm:$0xff]
        %v244 = vld [vmem:[%s184 + $0xc8] sm:$0xff]
        %v245 = vld [vmem:[%s184 + $0xd0] sm:$0xff]
        %v246 = vld [vmem:[%s184 + $0xd8] sm:$0xff]
        %v247 = vld [vmem:[%s184 + $0xe0] sm:$0xff]
        %v248 = vld [vmem:[%s184 + $0xe8] sm:$0xff]
        %v249 = vld [vmem:[%s184 + $0xf0] sm:$0xff]
        %v250 = vld [vmem:[%s184 + $0xf8] sm:$0xff]
        %v251 = vld [vmem:[%s184 + $0x100] sm:$0xff]
        %v252 = vld [vmem:[%s184 + $0x108] sm:$0xff]
        %v253 = vld [vmem:[%s184 + $0x110] sm:$0xff]
        %v254 = vld [vmem:[%s184 + $0x118] sm:$0xff]
        %v255 = vld [vmem:[%s184 + $0x120] sm:$0xff]
        %v256 = vld [vmem:[%s184 + $0x128] sm:$0xff]
        %v257 = vld [vmem:[%s184 + $0x130] sm:$0xff]
        %v258 = vld [vmem:[%s184 + $0x138] sm:$0xff]
        %v259 = vld [vmem:[%s184 + $0x140] sm:$0xff]
        %v260 = vld [vmem:[%s184 + $0x148] sm:$0xff]
        %v261 = vld [vmem:[%s184 + $0x150] sm:$0xff]
        %v262 = vld [vmem:[%s184 + $0x158] sm:$0xff]
        %v263 = vld [vmem:[%s184 + $0x160] sm:$0xff]
        %v264 = vld [vmem:[%s184 + $0x168] sm:$0xff]
        %v265 = vld [vmem:[%s184 + $0x170] sm:$0xff]
        %v266 = vld [vmem:[%s184 + $0x178] sm:$0xff]
        %v267 = vld [vmem:[%s184 + $0x180] sm:$0xff]
        %v268 = vld [vmem:[%s184 + $0x188] sm:$0xff]
        %v269 = vld [vmem:[%s184 + $0x190] sm:$0xff]
        %v270 = vld [vmem:[%s184 + $0x198] sm:$0xff]
        %v271 = vld [vmem:[%s184 + $0x1a0] sm:$0xff]
        %v272 = vld [vmem:[%s184 + $0x1a8] sm:$0xff]
        %v273 = vld [vmem:[%s184 + $0x1b0] sm:$0xff]
        %v274 = vld [vmem:[%s184 + $0x1b8] sm:$0xff]
        %v275 = vld [vmem:[%s184 + $0x1c0] sm:$0xff]
        %v276 = vld [vmem:[%s184 + $0x1c8] sm:$0xff]
        %v277 = vld [vmem:[%s184 + $0x1d0] sm:$0xff]
        %v278 = vld [vmem:[%s184 + $0x1d8] sm:$0xff]
        %v279 = vld [vmem:[%s184 + $0x1e0] sm:$0xff]
        %v280 = vld [vmem:[%s184 + $0x1e8] sm:$0xff]
        %v281 = vld [vmem:[%s184 + $0x1f0] sm:$0xff]
        %v282 = vld [vmem:[%s184 + $0x1f8] sm:$0xff]
        %v283 = vld [vmem:[%s184 + $0x200] sm:$0xff]
        %v284 = vld [vmem:[%s184 + $0x208] sm:$0xff]
        %v285 = vld [vmem:[%s184 + $0x210] sm:$0xff]
        %v286 = vld [vmem:[%s184 + $0x218] sm:$0xff]
        %v287 = vld [vmem:[%s184 + $0x220] sm:$0xff]
        %v288 = vld [vmem:[%s184 + $0x228] sm:$0xff]
        %v289 = vld [vmem:[%s184 + $0x230] sm:$0xff]
        %v290 = vld [vmem:[%s184 + $0x238] sm:$0xff]
        %v291 = vld [vmem:[%s184 + $0x240] sm:$0xff]
        %v292 = vld [vmem:[%s184 + $0x248] sm:$0xff]
        %v293 = vld [vmem:[%s184 + $0x250] sm:$0xff]
        %v294 = vld [vmem:[%s184 + $0x258] sm:$0xff]
        %v295 = vld [vmem:[%s184 + $0x260] sm:$0xff]
        %v296 = vld [vmem:[%s184 + $0x268] sm:$0xff]
        %v297 = vld [vmem:[%s184 + $0x270] sm:$0xff]
        %v298 = vld [vmem:[%s184 + $0x278] sm:$0xff]
        %v299 = vld [vmem:[%s184 + $0x280] sm:$0xff]
        %v300 = vld [vmem:[%s184 + $0x288] sm:$0xff]
        %v301 = vld [vmem:[%s184 + $0x290] sm:$0xff]
        %v302 = vld [vmem:[%s184 + $0x298] sm:$0xff]
        %v303 = vld [vmem:[%s184 + $0x2a0] sm:$0xff]
        %v304 = vld [vmem:[%s184 + $0x2a8] sm:$0xff]
        %v305 = vld [vmem:[%s184 + $0x2b0] sm:$0xff]
        %v306 = vld [vmem:[%s184 + $0x2b8] sm:$0xff]
        %v307 = vld [vmem:[%s184 + $0x2c0] sm:$0xff]
        %v308 = vld [vmem:[%s184 + $0x2c8] sm:$0xff]
        %v309 = vld [vmem:[%s184 + $0x2d0] sm:$0xff]
        %v310 = vld [vmem:[%s184 + $0x2d8] sm:$0xff]
        %v311 = vld [vmem:[%s184 + $0x2e0] sm:$0xff]
        %v312 = vld [vmem:[%s184 + $0x2e8] sm:$0xff]
        %v313 = vld [vmem:[%s184 + $0x2f0] sm:$0xff]
        %v314 = vld [vmem:[%s184 + $0x2f8] sm:$0xff]
        %v315 = vld [vmem:[%s184 + $0x300] sm:$0xff]
        %v316 = vld [vmem:[%s184 + $0x308] sm:$0xff]
        %v317 = vld [vmem:[%s184 + $0x310] sm:$0xff]
        %v318 = vld [vmem:[%s184 + $0x318] sm:$0xff]
        %v319 = vld [vmem:[%s184 + $0x320] sm:$0xff]
        %v320 = vld [vmem:[%s184 + $0x328] sm:$0xff]
        %v321 = vld [vmem:[%s184 + $0x330] sm:$0xff]
        %v322 = vld [vmem:[%s184 + $0x338] sm:$0xff]
        %v323 = vld [vmem:[%s184 + $0x340] sm:$0xff]
        %v324 = vld [vmem:[%s184 + $0x348] sm:$0xff]
        %v325 = vld [vmem:[%s184 + $0x350] sm:$0xff]
        %v326 = vld [vmem:[%s184 + $0x358] sm:$0xff]
        %v327 = vld [vmem:[%s184 + $0x360] sm:$0xff]
        %v328 = vld [vmem:[%s184 + $0x368] sm:$0xff]
        %v329 = vld [vmem:[%s184 + $0x370] sm:$0xff]
        %v330 = vld [vmem:[%s184 + $0x378] sm:$0xff]
        %v331 = vld [vmem:[%s184 + $0x380] sm:$0xff]
        %v332 = vld [vmem:[%s184 + $0x388] sm:$0xff]
        %v333 = vld [vmem:[%s184 + $0x390] sm:$0xff]
        %v334 = vld [vmem:[%s184 + $0x398] sm:$0xff]
        %v335 = vld [vmem:[%s184 + $0x3a0] sm:$0xff]
        %v336 = vld [vmem:[%s184 + $0x3a8] sm:$0xff]
        %v337 = vld [vmem:[%s184 + $0x3b0] sm:$0xff]
        %v338 = vld [vmem:[%s184 + $0x3b8] sm:$0xff]
        %v339 = vld [vmem:[%s184 + $0x3c0] sm:$0xff]
        %v340 = vld [vmem:[%s184 + $0x3c8] sm:$0xff]
        %v341 = vld [vmem:[%s184 + $0x3d0] sm:$0xff]
        %v342 = vld [vmem:[%s184 + $0x3d8] sm:$0xff]
        %v343 = vld [vmem:[%s184 + $0x3e0] sm:$0xff]
        %v344 = vld [vmem:[%s184 + $0x3e8] sm:$0xff]
        %v345 = vld [vmem:[%s184 + $0x3f0] sm:$0xff]
        %v346 = vld [vmem:[%s184 + $0x3f8] sm:$0xff]
        %v347 = vld [vmem:[#allocation5] sm:$0xf]
        %v348 = vld [vmem:[#allocation5 + $0x4] sm:$0xf]
        %v349 = vld [vmem:[#allocation5 + $0x8] sm:$0xf]
        %v350 = vld [vmem:[#allocation5 + $0xc] sm:$0xf]
        %v351 = vld [vmem:[#allocation5 + $0x10] sm:$0xf]
        %v352 = vld [vmem:[#allocation5 + $0x14] sm:$0xf]
        %v353 = vld [vmem:[#allocation5 + $0x18] sm:$0xf]
        %v354 = vld [vmem:[#allocation5 + $0x1c] sm:$0xf]
        %v355 = vld [vmem:[#allocation5 + $0x20] sm:$0xf]
        %v356 = vld [vmem:[#allocation5 + $0x24] sm:$0xf]
        %v357 = vld [vmem:[#allocation5 + $0x28] sm:$0xf]
        %v358 = vld [vmem:[#allocation5 + $0x2c] sm:$0xf]
        %v359 = vld [vmem:[#allocation5 + $0x30] sm:$0xf]
        %v360 = vld [vmem:[#allocation5 + $0x34] sm:$0xf]
        %v361 = vld [vmem:[#allocation5 + $0x38] sm:$0xf]
        %v362 = vld [vmem:[#allocation5 + $0x3c] sm:$0xf]
        %v363 = vld [vmem:[#allocation5 + $0x40] sm:$0xf]
        %v364 = vld [vmem:[#allocation5 + $0x44] sm:$0xf]
        %v365 = vld [vmem:[#allocation5 + $0x48] sm:$0xf]
        %v366 = vld [vmem:[#allocation5 + $0x4c] sm:$0xf]
        %v367 = vld [vmem:[#allocation5 + $0x50] sm:$0xf]
        %v368 = vld [vmem:[#allocation5 + $0x54] sm:$0xf]
        %v369 = vld [vmem:[#allocation5 + $0x58] sm:$0xf]
        %v370 = vld [vmem:[#allocation5 + $0x5c] sm:$0xf]
        %v371 = vld [vmem:[#allocation5 + $0x60] sm:$0xf]
        %v372 = vld [vmem:[#allocation5 + $0x64] sm:$0xf]
        %v373 = vld [vmem:[#allocation5 + $0x68] sm:$0xf]
        %v374 = vld [vmem:[#allocation5 + $0x6c] sm:$0xf]
        %v375 = vld [vmem:[#allocation5 + $0x70] sm:$0xf]
        %v376 = vld [vmem:[#allocation5 + $0x74] sm:$0xf]
        %v377 = vld [vmem:[#allocation5 + $0x78] sm:$0xf]
        %v378 = vld [vmem:[#allocation5 + $0x7c] sm:$0xf]
        %v507 = vunpack.c.l.b16 %v219
        %v508 = vunpack.c.h.b16 %v219
        %v509 = vunpack.c.l.b16 %v220
        %v510 = vunpack.c.h.b16 %v220
        %v511 = vunpack.c.l.b16 %v221
        %v512 = vunpack.c.h.b16 %v221
        %v513 = vunpack.c.l.b16 %v222
        %v514 = vunpack.c.h.b16 %v222
        %v515 = vunpack.c.l.b16 %v223
        %v516 = vunpack.c.h.b16 %v223
        %v517 = vunpack.c.l.b16 %v224
        %v518 = vunpack.c.h.b16 %v224
        %v519 = vunpack.c.l.b16 %v225
        %v520 = vunpack.c.h.b16 %v225
        %v521 = vunpack.c.l.b16 %v226
        %v522 = vunpack.c.h.b16 %v226
        %v523 = vunpack.c.l.b16 %v227
        %v524 = vunpack.c.h.b16 %v227
        %v525 = vunpack.c.l.b16 %v228
        %v526 = vunpack.c.h.b16 %v228
        %v527 = vunpack.c.l.b16 %v229
        %v528 = vunpack.c.h.b16 %v229
        %v529 = vunpack.c.l.b16 %v230
        %v530 = vunpack.c.h.b16 %v230
        %v531 = vunpack.c.l.b16 %v231
        %v532 = vunpack.c.h.b16 %v231
        %v533 = vunpack.c.l.b16 %v232
        %v534 = vunpack.c.h.b16 %v232
        %v535 = vunpack.c.l.b16 %v233
        %v536 = vunpack.c.h.b16 %v233
        %v537 = vunpack.c.l.b16 %v234
        %v538 = vunpack.c.h.b16 %v234
        %v539 = vunpack.c.l.b16 %v235
        %v540 = vunpack.c.h.b16 %v235
        %v541 = vunpack.c.l.b16 %v236
        %v542 = vunpack.c.h.b16 %v236
        %v543 = vunpack.c.l.b16 %v237
        %v544 = vunpack.c.h.b16 %v237
        %v545 = vunpack.c.l.b16 %v238
        %v546 = vunpack.c.h.b16 %v238
        %v547 = vunpack.c.l.b16 %v239
        %v548 = vunpack.c.h.b16 %v239
        %v549 = vunpack.c.l.b16 %v240
        %v550 = vunpack.c.h.b16 %v240
        %v551 = vunpack.c.l.b16 %v241
        %v552 = vunpack.c.h.b16 %v241
        %v553 = vunpack.c.l.b16 %v242
        %v554 = vunpack.c.h.b16 %v242
        %v555 = vunpack.c.l.b16 %v243
        %v556 = vunpack.c.h.b16 %v243
        %v557 = vunpack.c.l.b16 %v244
        %v558 = vunpack.c.h.b16 %v244
        %v559 = vunpack.c.l.b16 %v245
        %v560 = vunpack.c.h.b16 %v245
        %v561 = vunpack.c.l.b16 %v246
        %v562 = vunpack.c.h.b16 %v246
        %v563 = vunpack.c.l.b16 %v247
        %v564 = vunpack.c.h.b16 %v247
        %v565 = vunpack.c.l.b16 %v248
        %v566 = vunpack.c.h.b16 %v248
        %v567 = vunpack.c.l.b16 %v249
        %v568 = vunpack.c.h.b16 %v249
        %v569 = vunpack.c.l.b16 %v250
        %v570 = vunpack.c.h.b16 %v250
        %v571 = vunpack.c.l.b16 %v251
        %v572 = vunpack.c.h.b16 %v251
        %v573 = vunpack.c.l.b16 %v252
        %v574 = vunpack.c.h.b16 %v252
        %v575 = vunpack.c.l.b16 %v253
        %v576 = vunpack.c.h.b16 %v253
        %v577 = vunpack.c.l.b16 %v254
        %v578 = vunpack.c.h.b16 %v254
        %v579 = vunpack.c.l.b16 %v255
        %v580 = vunpack.c.h.b16 %v255
        %v581 = vunpack.c.l.b16 %v256
        %v582 = vunpack.c.h.b16 %v256
        %v583 = vunpack.c.l.b16 %v257
        %v584 = vunpack.c.h.b16 %v257
        %v585 = vunpack.c.l.b16 %v258
        %v586 = vunpack.c.h.b16 %v258
        %v587 = vunpack.c.l.b16 %v259
        %v588 = vunpack.c.h.b16 %v259
        %v589 = vunpack.c.l.b16 %v260
        %v590 = vunpack.c.h.b16 %v260
        %v591 = vunpack.c.l.b16 %v261
        %v592 = vunpack.c.h.b16 %v261
        %v593 = vunpack.c.l.b16 %v262
        %v594 = vunpack.c.h.b16 %v262
        %v595 = vunpack.c.l.b16 %v263
        %v596 = vunpack.c.h.b16 %v263
        %v597 = vunpack.c.l.b16 %v264
        %v598 = vunpack.c.h.b16 %v264
        %v599 = vunpack.c.l.b16 %v265
        %v600 = vunpack.c.h.b16 %v265
        %v601 = vunpack.c.l.b16 %v266
        %v602 = vunpack.c.h.b16 %v266
        %v603 = vunpack.c.l.b16 %v267
        %v604 = vunpack.c.h.b16 %v267
        %v605 = vunpack.c.l.b16 %v268
        %v606 = vunpack.c.h.b16 %v268
        %v607 = vunpack.c.l.b16 %v269
        %v608 = vunpack.c.h.b16 %v269
        %v609 = vunpack.c.l.b16 %v270
        %v610 = vunpack.c.h.b16 %v270
        %v611 = vunpack.c.l.b16 %v271
        %v612 = vunpack.c.h.b16 %v271
        %v613 = vunpack.c.l.b16 %v272
        %v614 = vunpack.c.h.b16 %v272
        %v615 = vunpack.c.l.b16 %v273
        %v616 = vunpack.c.h.b16 %v273
        %v617 = vunpack.c.l.b16 %v274
        %v618 = vunpack.c.h.b16 %v274
        %v619 = vunpack.c.l.b16 %v275
        %v620 = vunpack.c.h.b16 %v275
        %v621 = vunpack.c.l.b16 %v276
        %v622 = vunpack.c.h.b16 %v276
        %v623 = vunpack.c.l.b16 %v277
        %v624 = vunpack.c.h.b16 %v277
        %v625 = vunpack.c.l.b16 %v278
        %v626 = vunpack.c.h.b16 %v278
        %v627 = vunpack.c.l.b16 %v279
        %v628 = vunpack.c.h.b16 %v279
        %v629 = vunpack.c.l.b16 %v280
        %v630 = vunpack.c.h.b16 %v280
        %v631 = vunpack.c.l.b16 %v281
        %v632 = vunpack.c.h.b16 %v281
        %v633 = vunpack.c.l.b16 %v282
        %v634 = vunpack.c.h.b16 %v282
        %v635 = vunpack.c.l.b16 %v283
        %v636 = vunpack.c.h.b16 %v283
        %v637 = vunpack.c.l.b16 %v284
        %v638 = vunpack.c.h.b16 %v284
        %v639 = vunpack.c.l.b16 %v285
        %v640 = vunpack.c.h.b16 %v285
        %v641 = vunpack.c.l.b16 %v286
        %v642 = vunpack.c.h.b16 %v286
        %v643 = vunpack.c.l.b16 %v287
        %v644 = vunpack.c.h.b16 %v287
        %v645 = vunpack.c.l.b16 %v288
        %v646 = vunpack.c.h.b16 %v288
        %v647 = vunpack.c.l.b16 %v289
        %v648 = vunpack.c.h.b16 %v289
        %v649 = vunpack.c.l.b16 %v290
        %v650 = vunpack.c.h.b16 %v290
        %v651 = vunpack.c.l.b16 %v291
        %v652 = vunpack.c.h.b16 %v291
        %v653 = vunpack.c.l.b16 %v292
        %v654 = vunpack.c.h.b16 %v292
        %v655 = vunpack.c.l.b16 %v293
        %v656 = vunpack.c.h.b16 %v293
        %v657 = vunpack.c.l.b16 %v294
        %v658 = vunpack.c.h.b16 %v294
        %v659 = vunpack.c.l.b16 %v295
        %v660 = vunpack.c.h.b16 %v295
        %v661 = vunpack.c.l.b16 %v296
        %v662 = vunpack.c.h.b16 %v296
        %v663 = vunpack.c.l.b16 %v297
        %v664 = vunpack.c.h.b16 %v297
        %v665 = vunpack.c.l.b16 %v298
        %v666 = vunpack.c.h.b16 %v298
        %v667 = vunpack.c.l.b16 %v299
        %v668 = vunpack.c.h.b16 %v299
        %v669 = vunpack.c.l.b16 %v300
        %v670 = vunpack.c.h.b16 %v300
        %v671 = vunpack.c.l.b16 %v301
        %v672 = vunpack.c.h.b16 %v301
        %v673 = vunpack.c.l.b16 %v302
        %v674 = vunpack.c.h.b16 %v302
        %v675 = vunpack.c.l.b16 %v303
        %v676 = vunpack.c.h.b16 %v303
        %v677 = vunpack.c.l.b16 %v304
        %v678 = vunpack.c.h.b16 %v304
        %v679 = vunpack.c.l.b16 %v305
        %v680 = vunpack.c.h.b16 %v305
        %v681 = vunpack.c.l.b16 %v306
        %v682 = vunpack.c.h.b16 %v306
        %v683 = vunpack.c.l.b16 %v307
        %v684 = vunpack.c.h.b16 %v307
        %v685 = vunpack.c.l.b16 %v308
        %v686 = vunpack.c.h.b16 %v308
        %v687 = vunpack.c.l.b16 %v309
        %v688 = vunpack.c.h.b16 %v309
        %v689 = vunpack.c.l.b16 %v310
        %v690 = vunpack.c.h.b16 %v310
        %v691 = vunpack.c.l.b16 %v311
        %v692 = vunpack.c.h.b16 %v311
        %v693 = vunpack.c.l.b16 %v312
        %v694 = vunpack.c.h.b16 %v312
        %v695 = vunpack.c.l.b16 %v313
        %v696 = vunpack.c.h.b16 %v313
        %v697 = vunpack.c.l.b16 %v314
        %v698 = vunpack.c.h.b16 %v314
        %v699 = vunpack.c.l.b16 %v315
        %v700 = vunpack.c.h.b16 %v315
        %v701 = vunpack.c.l.b16 %v316
        %v702 = vunpack.c.h.b16 %v316
        %v703 = vunpack.c.l.b16 %v317
        %v704 = vunpack.c.h.b16 %v317
        %v705 = vunpack.c.l.b16 %v318
        %v706 = vunpack.c.h.b16 %v318
        %v707 = vunpack.c.l.b16 %v319
        %v708 = vunpack.c.h.b16 %v319
        %v709 = vunpack.c.l.b16 %v320
        %v710 = vunpack.c.h.b16 %v320
        %v711 = vunpack.c.l.b16 %v321
        %v712 = vunpack.c.h.b16 %v321
        %v713 = vunpack.c.l.b16 %v322
        %v714 = vunpack.c.h.b16 %v322
        %v715 = vunpack.c.l.b16 %v323
        %v716 = vunpack.c.h.b16 %v323
        %v717 = vunpack.c.l.b16 %v324
        %v718 = vunpack.c.h.b16 %v324
        %v719 = vunpack.c.l.b16 %v325
        %v720 = vunpack.c.h.b16 %v325
        %v721 = vunpack.c.l.b16 %v326
        %v722 = vunpack.c.h.b16 %v326
        %v723 = vunpack.c.l.b16 %v327
        %v724 = vunpack.c.h.b16 %v327
        %v725 = vunpack.c.l.b16 %v328
        %v726 = vunpack.c.h.b16 %v328
        %v727 = vunpack.c.l.b16 %v329
        %v728 = vunpack.c.h.b16 %v329
        %v729 = vunpack.c.l.b16 %v330
        %v730 = vunpack.c.h.b16 %v330
        %v731 = vunpack.c.l.b16 %v331
        %v732 = vunpack.c.h.b16 %v331
        %v733 = vunpack.c.l.b16 %v332
        %v734 = vunpack.c.h.b16 %v332
        %v735 = vunpack.c.l.b16 %v333
        %v736 = vunpack.c.h.b16 %v333
        %v737 = vunpack.c.l.b16 %v334
        %v738 = vunpack.c.h.b16 %v334
        %v739 = vunpack.c.l.b16 %v335
        %v740 = vunpack.c.h.b16 %v335
        %v741 = vunpack.c.l.b16 %v336
        %v742 = vunpack.c.h.b16 %v336
        %v743 = vunpack.c.l.b16 %v337
        %v744 = vunpack.c.h.b16 %v337
        %v745 = vunpack.c.l.b16 %v338
        %v746 = vunpack.c.h.b16 %v338
        %v747 = vunpack.c.l.b16 %v339
        %v748 = vunpack.c.h.b16 %v339
        %v749 = vunpack.c.l.b16 %v340
        %v750 = vunpack.c.h.b16 %v340
        %v751 = vunpack.c.l.b16 %v341
        %v752 = vunpack.c.h.b16 %v341
        %v753 = vunpack.c.l.b16 %v342
        %v754 = vunpack.c.h.b16 %v342
        %v755 = vunpack.c.l.b16 %v343
        %v756 = vunpack.c.h.b16 %v343
        %v757 = vunpack.c.l.b16 %v344
        %v758 = vunpack.c.h.b16 %v344
        %v759 = vunpack.c.l.b16 %v345
        %v760 = vunpack.c.h.b16 %v345
        %v761 = vunpack.c.l.b16 %v346
        %v762 = vunpack.c.h.b16 %v346
        %v763 = vpack.c.b16 %v509, %v507
        %v764 = vpack.c.b16 %v510, %v508
        %v765 = vpack.c.b16 %v513, %v511
        %v766 = vpack.c.b16 %v514, %v512
        %v767 = vpack.c.b16 %v517, %v515
        %v768 = vpack.c.b16 %v518, %v516
        %v769 = vpack.c.b16 %v521, %v519
        %v770 = vpack.c.b16 %v522, %v520
        %v771 = vpack.c.b16 %v525, %v523
        %v772 = vpack.c.b16 %v526, %v524
        %v773 = vpack.c.b16 %v529, %v527
        %v774 = vpack.c.b16 %v530, %v528
        %v775 = vpack.c.b16 %v533, %v531
        %v776 = vpack.c.b16 %v534, %v532
        %v777 = vpack.c.b16 %v537, %v535
        %v778 = vpack.c.b16 %v538, %v536
        %v779 = vpack.c.b16 %v541, %v539
        %v780 = vpack.c.b16 %v542, %v540
        %v781 = vpack.c.b16 %v545, %v543
        %v782 = vpack.c.b16 %v546, %v544
        %v783 = vpack.c.b16 %v549, %v547
        %v784 = vpack.c.b16 %v550, %v548
        %v785 = vpack.c.b16 %v553, %v551
        %v786 = vpack.c.b16 %v554, %v552
        %v787 = vpack.c.b16 %v557, %v555
        %v788 = vpack.c.b16 %v558, %v556
        %v789 = vpack.c.b16 %v561, %v559
        %v790 = vpack.c.b16 %v562, %v560
        %v791 = vpack.c.b16 %v565, %v563
        %v792 = vpack.c.b16 %v566, %v564
        %v793 = vpack.c.b16 %v569, %v567
        %v794 = vpack.c.b16 %v570, %v568
        %v795 = vpack.c.b16 %v573, %v571
        %v796 = vpack.c.b16 %v574, %v572
        %v797 = vpack.c.b16 %v577, %v575
        %v798 = vpack.c.b16 %v578, %v576
        %v799 = vpack.c.b16 %v581, %v579
        %v800 = vpack.c.b16 %v582, %v580
        %v801 = vpack.c.b16 %v585, %v583
        %v802 = vpack.c.b16 %v586, %v584
        %v803 = vpack.c.b16 %v589, %v587
        %v804 = vpack.c.b16 %v590, %v588
        %v805 = vpack.c.b16 %v593, %v591
        %v806 = vpack.c.b16 %v594, %v592
        %v807 = vpack.c.b16 %v597, %v595
        %v808 = vpack.c.b16 %v598, %v596
        %v809 = vpack.c.b16 %v601, %v599
        %v810 = vpack.c.b16 %v602, %v600
        %v811 = vpack.c.b16 %v605, %v603
        %v812 = vpack.c.b16 %v606, %v604
        %v813 = vpack.c.b16 %v609, %v607
        %v814 = vpack.c.b16 %v610, %v608
        %v815 = vpack.c.b16 %v613, %v611
        %v816 = vpack.c.b16 %v614, %v612
        %v817 = vpack.c.b16 %v617, %v615
        %v818 = vpack.c.b16 %v618, %v616
        %v819 = vpack.c.b16 %v621, %v619
        %v820 = vpack.c.b16 %v622, %v620
        %v821 = vpack.c.b16 %v625, %v623
        %v822 = vpack.c.b16 %v626, %v624
        %v823 = vpack.c.b16 %v629, %v627
        %v824 = vpack.c.b16 %v630, %v628
        %v825 = vpack.c.b16 %v633, %v631
        %v826 = vpack.c.b16 %v634, %v632
        %v827 = vpack.c.b16 %v637, %v635
        %v828 = vpack.c.b16 %v638, %v636
        %v829 = vpack.c.b16 %v641, %v639
        %v830 = vpack.c.b16 %v642, %v640
        %v831 = vpack.c.b16 %v645, %v643
        %v832 = vpack.c.b16 %v646, %v644
        %v833 = vpack.c.b16 %v649, %v647
        %v834 = vpack.c.b16 %v650, %v648
        %v835 = vpack.c.b16 %v653, %v651
        %v836 = vpack.c.b16 %v654, %v652
        %v837 = vpack.c.b16 %v657, %v655
        %v838 = vpack.c.b16 %v658, %v656
        %v839 = vpack.c.b16 %v661, %v659
        %v840 = vpack.c.b16 %v662, %v660
        %v841 = vpack.c.b16 %v665, %v663
        %v842 = vpack.c.b16 %v666, %v664
        %v843 = vpack.c.b16 %v669, %v667
        %v844 = vpack.c.b16 %v670, %v668
        %v845 = vpack.c.b16 %v673, %v671
        %v846 = vpack.c.b16 %v674, %v672
        %v847 = vpack.c.b16 %v677, %v675
        %v848 = vpack.c.b16 %v678, %v676
        %v849 = vpack.c.b16 %v681, %v679
        %v850 = vpack.c.b16 %v682, %v680
        %v851 = vpack.c.b16 %v685, %v683
        %v852 = vpack.c.b16 %v686, %v684
        %v853 = vpack.c.b16 %v689, %v687
        %v854 = vpack.c.b16 %v690, %v688
        %v855 = vpack.c.b16 %v693, %v691
        %v856 = vpack.c.b16 %v694, %v692
        %v857 = vpack.c.b16 %v697, %v695
        %v858 = vpack.c.b16 %v698, %v696
        %v859 = vpack.c.b16 %v701, %v699
        %v860 = vpack.c.b16 %v702, %v700
        %v861 = vpack.c.b16 %v705, %v703
        %v862 = vpack.c.b16 %v706, %v704
        %v863 = vpack.c.b16 %v709, %v707
        %v864 = vpack.c.b16 %v710, %v708
        %v865 = vpack.c.b16 %v713, %v711
        %v866 = vpack.c.b16 %v714, %v712
        %v867 = vpack.c.b16 %v717, %v715
        %v868 = vpack.c.b16 %v718, %v716
        %v869 = vpack.c.b16 %v721, %v719
        %v870 = vpack.c.b16 %v722, %v720
        %v871 = vpack.c.b16 %v725, %v723
        %v872 = vpack.c.b16 %v726, %v724
        %v873 = vpack.c.b16 %v729, %v727
        %v874 = vpack.c.b16 %v730, %v728
        %v875 = vpack.c.b16 %v733, %v731
        %v876 = vpack.c.b16 %v734, %v732
        %v877 = vpack.c.b16 %v737, %v735
        %v878 = vpack.c.b16 %v738, %v736
        %v879 = vpack.c.b16 %v741, %v739
        %v880 = vpack.c.b16 %v742, %v740
        %v881 = vpack.c.b16 %v745, %v743
        %v882 = vpack.c.b16 %v746, %v744
        %v883 = vpack.c.b16 %v749, %v747
        %v884 = vpack.c.b16 %v750, %v748
        %v885 = vpack.c.b16 %v753, %v751
        %v886 = vpack.c.b16 %v754, %v752
        %v887 = vpack.c.b16 %v757, %v755
        %v888 = vpack.c.b16 %v758, %v756
        %v889 = vpack.c.b16 %v761, %v759
        %v890 = vpack.c.b16 %v762, %v760
        %v1051 = vunpack.c.l.b16 %v347
        %v1052 = vunpack.c.l.b16 %v348
        %v1053 = vunpack.c.l.b16 %v349
        %v1054 = vunpack.c.l.b16 %v350
        %v1055 = vunpack.c.l.b16 %v351
        %v1056 = vunpack.c.l.b16 %v352
        %v1057 = vunpack.c.l.b16 %v353
        %v1058 = vunpack.c.l.b16 %v354
        %v1059 = vunpack.c.l.b16 %v355
        %v1060 = vunpack.c.l.b16 %v356
        %v1061 = vunpack.c.l.b16 %v357
        %v1062 = vunpack.c.l.b16 %v358
        %v1063 = vunpack.c.l.b16 %v359
        %v1064 = vunpack.c.l.b16 %v360
        %v1065 = vunpack.c.l.b16 %v361
        %v1066 = vunpack.c.l.b16 %v362
        %v1067 = vunpack.c.l.b16 %v363
        %v1068 = vunpack.c.l.b16 %v364
        %v1069 = vunpack.c.l.b16 %v365
        %v1070 = vunpack.c.l.b16 %v366
        %v1071 = vunpack.c.l.b16 %v367
        %v1072 = vunpack.c.l.b16 %v368
        %v1073 = vunpack.c.l.b16 %v369
        %v1074 = vunpack.c.l.b16 %v370
        %v1075 = vunpack.c.l.b16 %v371
        %v1076 = vunpack.c.l.b16 %v372
        %v1077 = vunpack.c.l.b16 %v373
        %v1078 = vunpack.c.l.b16 %v374
        %v1079 = vunpack.c.l.b16 %v375
        %v1080 = vunpack.c.l.b16 %v376
        %v1081 = vunpack.c.l.b16 %v377
        %v1082 = vunpack.c.l.b16 %v378
        %v1083 = vpack.c.b16 %v1052, %v1051
        %v1084 = vpack.c.b16 %v1054, %v1053
        %v1085 = vpack.c.b16 %v1056, %v1055
        %v1086 = vpack.c.b16 %v1058, %v1057
        %v1087 = vpack.c.b16 %v1060, %v1059
        %v1088 = vpack.c.b16 %v1062, %v1061
        %v1089 = vpack.c.b16 %v1064, %v1063
        %v1090 = vpack.c.b16 %v1066, %v1065
        %v1091 = vpack.c.b16 %v1068, %v1067
        %v1092 = vpack.c.b16 %v1070, %v1069
        %v1093 = vpack.c.b16 %v1072, %v1071
        %v1094 = vpack.c.b16 %v1074, %v1073
        %v1095 = vpack.c.b16 %v1076, %v1075
        %v1096 = vpack.c.b16 %v1078, %v1077
        %v1097 = vpack.c.b16 %v1080, %v1079
        %v1098 = vpack.c.b16 %v1082, %v1081
        %1115 = vmatprep.subr.bf16.mxu0 0
        %1116 = vmatpush1.bf16.msra.mxu0 %v1090
        %1117 = vmatprep.subr.bf16.mxu0 0
        %1118 = vmatpush1.bf16.msra.mxu0 %v1089
        %1119 = vmatprep.subr.bf16.mxu0 0
        %1120 = vmatpush1.bf16.msra.mxu0 %v1088
        %1121 = vmatprep.subr.bf16.mxu0 0
        %1122 = vmatpush1.bf16.msra.mxu0 %v1087
        %1123 = vmatprep.subr.bf16.mxu0 0
        %1124 = vmatpush1.bf16.msra.mxu0 %v1086
        %1125 = vmatprep.subr.bf16.mxu0 0
        %1126 = vmatpush1.bf16.msra.mxu0 %v1085
        %1127 = vmatprep.subr.bf16.mxu0 0
        %1128 = vmatpush1.bf16.msra.mxu0 %v1084
        %1129 = vmatprep.subr.bf16.mxu0 0
        %1130 = vmatpush1.bf16.msra.mxu0 %v1083
        %1131 = vmatprep.subr.bf16.mxu0 0
        %1132 = vmatpush2.bf16.msra.mxu0 %v1098
        %1133 = vmatprep.subr.bf16.mxu0 0
        %1134 = vmatpush2.bf16.msra.mxu0 %v1097
        %1135 = vmatprep.subr.bf16.mxu0 0
        %1136 = vmatpush2.bf16.msra.mxu0 %v1096
        %1137 = vmatprep.subr.bf16.mxu0 0
        %1138 = vmatpush2.bf16.msra.mxu0 %v1095
        %1139 = vmatprep.subr.bf16.mxu0 0
        %1140 = vmatpush2.bf16.msra.mxu0 %v1094
        %1141 = vmatprep.subr.bf16.mxu0 0
        %1142 = vmatpush2.bf16.msra.mxu0 %v1093
        %1143 = vmatprep.subr.bf16.mxu0 0
        %1144 = vmatpush2.bf16.msra.mxu0 %v1092
        %1145 = vmatprep.subr.bf16.mxu0 0
        %1146 = vmatpush2.bf16.msra.mxu0 %v1091
        %1147 = vmatprep.mubr.bf16.mxu0 %v764
        %1148 = vmatmul.mubr.bf16.gmra.mxu0 %v763
        %v1149 = vpop.f32.mrf.mxu0
        %v1150 = vadd.f32 0.0, %v1149
        %v1151 = vpop.f32.mrf.mxu0
        %v1152 = vpop.f32.mrf.mxu0
        %v1153 = vadd.f32 0.0, %v1152
        %v1154 = vpop.f32.mrf.mxu0
        %1155 = vmatprep.mubr.bf16.mxu0 %v766
        %1156 = vmatmul.mubr.bf16.gmra.mxu0 %v765
        %v1157 = vpop.f32.mrf.mxu0
        %v1158 = vadd.f32 0.0, %v1157
        %v1159 = vpop.f32.mrf.mxu0
        %v1160 = vpop.f32.mrf.mxu0
        %v1161 = vadd.f32 0.0, %v1160
        %v1162 = vpop.f32.mrf.mxu0
        %1163 = vmatprep.mubr.bf16.mxu0 %v768
        %1164 = vmatmul.mubr.bf16.gmra.mxu0 %v767
        %v1165 = vpop.f32.mrf.mxu0
        %v1166 = vadd.f32 0.0, %v1165
        %v1167 = vpop.f32.mrf.mxu0
        %v1168 = vpop.f32.mrf.mxu0
        %v1169 = vadd.f32 0.0, %v1168
        %v1170 = vpop.f32.mrf.mxu0
        %1171 = vmatprep.mubr.bf16.mxu0 %v770
        %1172 = vmatmul.mubr.bf16.gmra.mxu0 %v769
        %v1173 = vpop.f32.mrf.mxu0
        %v1174 = vadd.f32 0.0, %v1173
        %v1175 = vpop.f32.mrf.mxu0
        %v1176 = vpop.f32.mrf.mxu0
        %v1177 = vadd.f32 0.0, %v1176
        %v1178 = vpop.f32.mrf.mxu0
        %1179 = vmatprep.mubr.bf16.mxu0 %v772
        %1180 = vmatmul.mubr.bf16.gmra.mxu0 %v771
        %v1181 = vpop.f32.mrf.mxu0
        %v1182 = vadd.f32 0.0, %v1181
        %v1183 = vpop.f32.mrf.mxu0
        %v1184 = vpop.f32.mrf.mxu0
        %v1185 = vadd.f32 0.0, %v1184
        %v1186 = vpop.f32.mrf.mxu0
        %1187 = vmatprep.mubr.bf16.mxu0 %v774
        %1188 = vmatmul.mubr.bf16.gmra.mxu0 %v773
        %v1189 = vpop.f32.mrf.mxu0
        %v1190 = vadd.f32 0.0, %v1189
        %v1191 = vpop.f32.mrf.mxu0
        %v1192 = vpop.f32.mrf.mxu0
        %v1193 = vadd.f32 0.0, %v1192
        %v1194 = vpop.f32.mrf.mxu0
        %1195 = vmatprep.mubr.bf16.mxu0 %v776
        %1196 = vmatmul.mubr.bf16.gmra.mxu0 %v775
        %v1197 = vpop.f32.mrf.mxu0
        %v1198 = vadd.f32 0.0, %v1197
        %v1199 = vpop.f32.mrf.mxu0
        %v1200 = vpop.f32.mrf.mxu0
        %v1201 = vadd.f32 0.0, %v1200
        %v1202 = vpop.f32.mrf.mxu0
        %1203 = vmatprep.mubr.bf16.mxu0 %v778
        %1204 = vmatmul.mubr.bf16.gmra.mxu0 %v777
        %v1205 = vpop.f32.mrf.mxu0
        %v1206 = vadd.f32 0.0, %v1205
        %v1207 = vpop.f32.mrf.mxu0
        %v1208 = vpop.f32.mrf.mxu0
        %v1209 = vadd.f32 0.0, %v1208
        %v1210 = vpop.f32.mrf.mxu0
        %1211 = vmatprep.mubr.bf16.mxu0 %v780
        %1212 = vmatmul.mubr.bf16.gmra.mxu0 %v779
        %v1213 = vpop.f32.mrf.mxu0
        %v1214 = vadd.f32 0.0, %v1213
        %v1215 = vpop.f32.mrf.mxu0
        %v1216 = vpop.f32.mrf.mxu0
        %v1217 = vadd.f32 0.0, %v1216
        %v1218 = vpop.f32.mrf.mxu0
        %1219 = vmatprep.mubr.bf16.mxu0 %v782
        %1220 = vmatmul.mubr.bf16.gmra.mxu0 %v781
        %v1221 = vpop.f32.mrf.mxu0
        %v1222 = vadd.f32 0.0, %v1221
        %v1223 = vpop.f32.mrf.mxu0
        %v1224 = vpop.f32.mrf.mxu0
        %v1225 = vadd.f32 0.0, %v1224
        %v1226 = vpop.f32.mrf.mxu0
        %1227 = vmatprep.mubr.bf16.mxu0 %v784
        %1228 = vmatmul.mubr.bf16.gmra.mxu0 %v783
        %v1229 = vpop.f32.mrf.mxu0
        %v1230 = vadd.f32 0.0, %v1229
        %v1231 = vpop.f32.mrf.mxu0
        %v1232 = vpop.f32.mrf.mxu0
        %v1233 = vadd.f32 0.0, %v1232
        %v1234 = vpop.f32.mrf.mxu0
        %1235 = vmatprep.mubr.bf16.mxu0 %v786
        %1236 = vmatmul.mubr.bf16.gmra.mxu0 %v785
        %v1237 = vpop.f32.mrf.mxu0
        %v1238 = vadd.f32 0.0, %v1237
        %v1239 = vpop.f32.mrf.mxu0
        %v1240 = vpop.f32.mrf.mxu0
        %v1241 = vadd.f32 0.0, %v1240
        %v1242 = vpop.f32.mrf.mxu0
        %1243 = vmatprep.mubr.bf16.mxu0 %v788
        %1244 = vmatmul.mubr.bf16.gmra.mxu0 %v787
        %v1245 = vpop.f32.mrf.mxu0
        %v1246 = vadd.f32 0.0, %v1245
        %v1247 = vpop.f32.mrf.mxu0
        %v1248 = vpop.f32.mrf.mxu0
        %v1249 = vadd.f32 0.0, %v1248
        %v1250 = vpop.f32.mrf.mxu0
        %1251 = vmatprep.mubr.bf16.mxu0 %v790
        %1252 = vmatmul.mubr.bf16.gmra.mxu0 %v789
        %v1253 = vpop.f32.mrf.mxu0
        %v1254 = vadd.f32 0.0, %v1253
        %v1255 = vpop.f32.mrf.mxu0
        %v1256 = vpop.f32.mrf.mxu0
        %v1257 = vadd.f32 0.0, %v1256
        %v1258 = vpop.f32.mrf.mxu0
        %1259 = vmatprep.mubr.bf16.mxu0 %v792
        %1260 = vmatmul.mubr.bf16.gmra.mxu0 %v791
        %v1261 = vpop.f32.mrf.mxu0
        %v1262 = vadd.f32 0.0, %v1261
        %v1263 = vpop.f32.mrf.mxu0
        %v1264 = vpop.f32.mrf.mxu0
        %v1265 = vadd.f32 0.0, %v1264
        %v1266 = vpop.f32.mrf.mxu0
        %1267 = vmatprep.mubr.bf16.mxu0 %v794
        %1268 = vmatmul.mubr.bf16.gmra.mxu0 %v793
        %v1269 = vpop.f32.mrf.mxu0
        %v1270 = vadd.f32 0.0, %v1269
        %v1271 = vpop.f32.mrf.mxu0
        %v1272 = vpop.f32.mrf.mxu0
        %v1273 = vadd.f32 0.0, %v1272
        %v1274 = vpop.f32.mrf.mxu0
        %1275 = vmatprep.mubr.bf16.mxu0 %v796
        %1276 = vmatmul.mubr.bf16.gmra.mxu0 %v795
        %v1277 = vpop.f32.mrf.mxu0
        %v1278 = vadd.f32 0.0, %v1277
        %v1279 = vpop.f32.mrf.mxu0
        %v1280 = vpop.f32.mrf.mxu0
        %v1281 = vadd.f32 0.0, %v1280
        %v1282 = vpop.f32.mrf.mxu0
        %1283 = vmatprep.mubr.bf16.mxu0 %v798
        %1284 = vmatmul.mubr.bf16.gmra.mxu0 %v797
        %v1285 = vpop.f32.mrf.mxu0
        %v1286 = vadd.f32 0.0, %v1285
        %v1287 = vpop.f32.mrf.mxu0
        %v1288 = vpop.f32.mrf.mxu0
        %v1289 = vadd.f32 0.0, %v1288
        %v1290 = vpop.f32.mrf.mxu0
        %1291 = vmatprep.mubr.bf16.mxu0 %v800
        %1292 = vmatmul.mubr.bf16.gmra.mxu0 %v799
        %v1293 = vpop.f32.mrf.mxu0
        %v1294 = vadd.f32 0.0, %v1293
        %v1295 = vpop.f32.mrf.mxu0
        %v1296 = vpop.f32.mrf.mxu0
        %v1297 = vadd.f32 0.0, %v1296
        %v1298 = vpop.f32.mrf.mxu0
        %1299 = vmatprep.mubr.bf16.mxu0 %v802
        %1300 = vmatmul.mubr.bf16.gmra.mxu0 %v801
        %v1301 = vpop.f32.mrf.mxu0
        %v1302 = vadd.f32 0.0, %v1301
        %v1303 = vpop.f32.mrf.mxu0
        %v1304 = vpop.f32.mrf.mxu0
        %v1305 = vadd.f32 0.0, %v1304
        %v1306 = vpop.f32.mrf.mxu0
        %1307 = vmatprep.mubr.bf16.mxu0 %v804
        %1308 = vmatmul.mubr.bf16.gmra.mxu0 %v803
        %v1309 = vpop.f32.mrf.mxu0
        %v1310 = vadd.f32 0.0, %v1309
        %v1311 = vpop.f32.mrf.mxu0
        %v1312 = vpop.f32.mrf.mxu0
        %v1313 = vadd.f32 0.0, %v1312
        %v1314 = vpop.f32.mrf.mxu0
        %1315 = vmatprep.mubr.bf16.mxu0 %v806
        %1316 = vmatmul.mubr.bf16.gmra.mxu0 %v805
        %v1317 = vpop.f32.mrf.mxu0
        %v1318 = vadd.f32 0.0, %v1317
        %v1319 = vpop.f32.mrf.mxu0
        %v1320 = vpop.f32.mrf.mxu0
        %v1321 = vadd.f32 0.0, %v1320
        %v1322 = vpop.f32.mrf.mxu0
        %1323 = vmatprep.mubr.bf16.mxu0 %v808
        %1324 = vmatmul.mubr.bf16.gmra.mxu0 %v807
        %v1325 = vpop.f32.mrf.mxu0
        %v1326 = vadd.f32 0.0, %v1325
        %v1327 = vpop.f32.mrf.mxu0
        %v1328 = vpop.f32.mrf.mxu0
        %v1329 = vadd.f32 0.0, %v1328
        %v1330 = vpop.f32.mrf.mxu0
        %1331 = vmatprep.mubr.bf16.mxu0 %v810
        %1332 = vmatmul.mubr.bf16.gmra.mxu0 %v809
        %v1333 = vpop.f32.mrf.mxu0
        %v1334 = vadd.f32 0.0, %v1333
        %v1335 = vpop.f32.mrf.mxu0
        %v1336 = vpop.f32.mrf.mxu0
        %v1337 = vadd.f32 0.0, %v1336
        %v1338 = vpop.f32.mrf.mxu0
        %1339 = vmatprep.mubr.bf16.mxu0 %v812
        %1340 = vmatmul.mubr.bf16.gmra.mxu0 %v811
        %v1341 = vpop.f32.mrf.mxu0
        %v1342 = vadd.f32 0.0, %v1341
        %v1343 = vpop.f32.mrf.mxu0
        %v1344 = vpop.f32.mrf.mxu0
        %v1345 = vadd.f32 0.0, %v1344
        %v1346 = vpop.f32.mrf.mxu0
        %1347 = vmatprep.mubr.bf16.mxu0 %v814
        %1348 = vmatmul.mubr.bf16.gmra.mxu0 %v813
        %v1349 = vpop.f32.mrf.mxu0
        %v1350 = vadd.f32 0.0, %v1349
        %v1351 = vpop.f32.mrf.mxu0
        %v1352 = vpop.f32.mrf.mxu0
        %v1353 = vadd.f32 0.0, %v1352
        %v1354 = vpop.f32.mrf.mxu0
        %1355 = vmatprep.mubr.bf16.mxu0 %v816
        %1356 = vmatmul.mubr.bf16.gmra.mxu0 %v815
        %v1357 = vpop.f32.mrf.mxu0
        %v1358 = vadd.f32 0.0, %v1357
        %v1359 = vpop.f32.mrf.mxu0
        %v1360 = vpop.f32.mrf.mxu0
        %v1361 = vadd.f32 0.0, %v1360
        %v1362 = vpop.f32.mrf.mxu0
        %1363 = vmatprep.mubr.bf16.mxu0 %v818
        %1364 = vmatmul.mubr.bf16.gmra.mxu0 %v817
        %v1365 = vpop.f32.mrf.mxu0
        %v1366 = vadd.f32 0.0, %v1365
        %v1367 = vpop.f32.mrf.mxu0
        %v1368 = vpop.f32.mrf.mxu0
        %v1369 = vadd.f32 0.0, %v1368
        %v1370 = vpop.f32.mrf.mxu0
        %1371 = vmatprep.mubr.bf16.mxu0 %v820
        %1372 = vmatmul.mubr.bf16.gmra.mxu0 %v819
        %v1373 = vpop.f32.mrf.mxu0
        %v1374 = vadd.f32 0.0, %v1373
        %v1375 = vpop.f32.mrf.mxu0
        %v1376 = vpop.f32.mrf.mxu0
        %v1377 = vadd.f32 0.0, %v1376
        %v1378 = vpop.f32.mrf.mxu0
        %1379 = vmatprep.mubr.bf16.mxu0 %v822
        %1380 = vmatmul.mubr.bf16.gmra.mxu0 %v821
        %v1381 = vpop.f32.mrf.mxu0
        %v1382 = vadd.f32 0.0, %v1381
        %v1383 = vpop.f32.mrf.mxu0
        %v1384 = vpop.f32.mrf.mxu0
        %v1385 = vadd.f32 0.0, %v1384
        %v1386 = vpop.f32.mrf.mxu0
        %1387 = vmatprep.mubr.bf16.mxu0 %v824
        %1388 = vmatmul.mubr.bf16.gmra.mxu0 %v823
        %v1389 = vpop.f32.mrf.mxu0
        %v1390 = vadd.f32 0.0, %v1389
        %v1391 = vpop.f32.mrf.mxu0
        %v1392 = vpop.f32.mrf.mxu0
        %v1393 = vadd.f32 0.0, %v1392
        %v1394 = vpop.f32.mrf.mxu0
        %1395 = vmatprep.mubr.bf16.mxu0 %v826
        %1396 = vmatmul.mubr.bf16.gmra.mxu0 %v825
        %v1397 = vpop.f32.mrf.mxu0
        %v1398 = vadd.f32 0.0, %v1397
        %v1399 = vpop.f32.mrf.mxu0
        %v1400 = vpop.f32.mrf.mxu0
        %v1401 = vadd.f32 0.0, %v1400
        %v1402 = vpop.f32.mrf.mxu0
        %1403 = vmatprep.mubr.bf16.mxu0 %v828
        %1404 = vmatmul.mubr.bf16.gmra.mxu0 %v827
        %v1405 = vpop.f32.mrf.mxu0
        %v1406 = vadd.f32 0.0, %v1405
        %v1407 = vpop.f32.mrf.mxu0
        %v1408 = vpop.f32.mrf.mxu0
        %v1409 = vadd.f32 0.0, %v1408
        %v1410 = vpop.f32.mrf.mxu0
        %1411 = vmatprep.mubr.bf16.mxu0 %v830
        %1412 = vmatmul.mubr.bf16.gmra.mxu0 %v829
        %v1413 = vpop.f32.mrf.mxu0
        %v1414 = vadd.f32 0.0, %v1413
        %v1415 = vpop.f32.mrf.mxu0
        %v1416 = vpop.f32.mrf.mxu0
        %v1417 = vadd.f32 0.0, %v1416
        %v1418 = vpop.f32.mrf.mxu0
        %1419 = vmatprep.mubr.bf16.mxu0 %v832
        %1420 = vmatmul.mubr.bf16.gmra.mxu0 %v831
        %v1421 = vpop.f32.mrf.mxu0
        %v1422 = vadd.f32 0.0, %v1421
        %v1423 = vpop.f32.mrf.mxu0
        %v1424 = vpop.f32.mrf.mxu0
        %v1425 = vadd.f32 0.0, %v1424
        %v1426 = vpop.f32.mrf.mxu0
        %1427 = vmatprep.mubr.bf16.mxu0 %v834
        %1428 = vmatmul.mubr.bf16.gmra.mxu0 %v833
        %v1429 = vpop.f32.mrf.mxu0
        %v1430 = vadd.f32 0.0, %v1429
        %v1431 = vpop.f32.mrf.mxu0
        %v1432 = vpop.f32.mrf.mxu0
        %v1433 = vadd.f32 0.0, %v1432
        %v1434 = vpop.f32.mrf.mxu0
        %1435 = vmatprep.mubr.bf16.mxu0 %v836
        %1436 = vmatmul.mubr.bf16.gmra.mxu0 %v835
        %v1437 = vpop.f32.mrf.mxu0
        %v1438 = vadd.f32 0.0, %v1437
        %v1439 = vpop.f32.mrf.mxu0
        %v1440 = vpop.f32.mrf.mxu0
        %v1441 = vadd.f32 0.0, %v1440
        %v1442 = vpop.f32.mrf.mxu0
        %1443 = vmatprep.mubr.bf16.mxu0 %v838
        %1444 = vmatmul.mubr.bf16.gmra.mxu0 %v837
        %v1445 = vpop.f32.mrf.mxu0
        %v1446 = vadd.f32 0.0, %v1445
        %v1447 = vpop.f32.mrf.mxu0
        %v1448 = vpop.f32.mrf.mxu0
        %v1449 = vadd.f32 0.0, %v1448
        %v1450 = vpop.f32.mrf.mxu0
        %1451 = vmatprep.mubr.bf16.mxu0 %v840
        %1452 = vmatmul.mubr.bf16.gmra.mxu0 %v839
        %v1453 = vpop.f32.mrf.mxu0
        %v1454 = vadd.f32 0.0, %v1453
        %v1455 = vpop.f32.mrf.mxu0
        %v1456 = vpop.f32.mrf.mxu0
        %v1457 = vadd.f32 0.0, %v1456
        %v1458 = vpop.f32.mrf.mxu0
        %1459 = vmatprep.mubr.bf16.mxu0 %v842
        %1460 = vmatmul.mubr.bf16.gmra.mxu0 %v841
        %v1461 = vpop.f32.mrf.mxu0
        %v1462 = vadd.f32 0.0, %v1461
        %v1463 = vpop.f32.mrf.mxu0
        %v1464 = vpop.f32.mrf.mxu0
        %v1465 = vadd.f32 0.0, %v1464
        %v1466 = vpop.f32.mrf.mxu0
        %1467 = vmatprep.mubr.bf16.mxu0 %v844
        %1468 = vmatmul.mubr.bf16.gmra.mxu0 %v843
        %v1469 = vpop.f32.mrf.mxu0
        %v1470 = vadd.f32 0.0, %v1469
        %v1471 = vpop.f32.mrf.mxu0
        %v1472 = vpop.f32.mrf.mxu0
        %v1473 = vadd.f32 0.0, %v1472
        %v1474 = vpop.f32.mrf.mxu0
        %1475 = vmatprep.mubr.bf16.mxu0 %v846
        %1476 = vmatmul.mubr.bf16.gmra.mxu0 %v845
        %v1477 = vpop.f32.mrf.mxu0
        %v1478 = vadd.f32 0.0, %v1477
        %v1479 = vpop.f32.mrf.mxu0
        %v1480 = vpop.f32.mrf.mxu0
        %v1481 = vadd.f32 0.0, %v1480
        %v1482 = vpop.f32.mrf.mxu0
        %1483 = vmatprep.mubr.bf16.mxu0 %v848
        %1484 = vmatmul.mubr.bf16.gmra.mxu0 %v847
        %v1485 = vpop.f32.mrf.mxu0
        %v1486 = vadd.f32 0.0, %v1485
        %v1487 = vpop.f32.mrf.mxu0
        %v1488 = vpop.f32.mrf.mxu0
        %v1489 = vadd.f32 0.0, %v1488
        %v1490 = vpop.f32.mrf.mxu0
        %1491 = vmatprep.mubr.bf16.mxu0 %v850
        %1492 = vmatmul.mubr.bf16.gmra.mxu0 %v849
        %v1493 = vpop.f32.mrf.mxu0
        %v1494 = vadd.f32 0.0, %v1493
        %v1495 = vpop.f32.mrf.mxu0
        %v1496 = vpop.f32.mrf.mxu0
        %v1497 = vadd.f32 0.0, %v1496
        %v1498 = vpop.f32.mrf.mxu0
        %1499 = vmatprep.mubr.bf16.mxu0 %v852
        %1500 = vmatmul.mubr.bf16.gmra.mxu0 %v851
        %v1501 = vpop.f32.mrf.mxu0
        %v1502 = vadd.f32 0.0, %v1501
        %v1503 = vpop.f32.mrf.mxu0
        %v1504 = vpop.f32.mrf.mxu0
        %v1505 = vadd.f32 0.0, %v1504
        %v1506 = vpop.f32.mrf.mxu0
        %1507 = vmatprep.mubr.bf16.mxu0 %v854
        %1508 = vmatmul.mubr.bf16.gmra.mxu0 %v853
        %v1509 = vpop.f32.mrf.mxu0
        %v1510 = vadd.f32 0.0, %v1509
        %v1511 = vpop.f32.mrf.mxu0
        %v1512 = vpop.f32.mrf.mxu0
        %v1513 = vadd.f32 0.0, %v1512
        %v1514 = vpop.f32.mrf.mxu0
        %1515 = vmatprep.mubr.bf16.mxu0 %v856
        %1516 = vmatmul.mubr.bf16.gmra.mxu0 %v855
        %v1517 = vpop.f32.mrf.mxu0
        %v1518 = vadd.f32 0.0, %v1517
        %v1519 = vpop.f32.mrf.mxu0
        %v1520 = vpop.f32.mrf.mxu0
        %v1521 = vadd.f32 0.0, %v1520
        %v1522 = vpop.f32.mrf.mxu0
        %1523 = vmatprep.mubr.bf16.mxu0 %v858
        %1524 = vmatmul.mubr.bf16.gmra.mxu0 %v857
        %v1525 = vpop.f32.mrf.mxu0
        %v1526 = vadd.f32 0.0, %v1525
        %v1527 = vpop.f32.mrf.mxu0
        %v1528 = vpop.f32.mrf.mxu0
        %v1529 = vadd.f32 0.0, %v1528
        %v1530 = vpop.f32.mrf.mxu0
        %1531 = vmatprep.mubr.bf16.mxu0 %v860
        %1532 = vmatmul.mubr.bf16.gmra.mxu0 %v859
        %v1533 = vpop.f32.mrf.mxu0
        %v1534 = vadd.f32 0.0, %v1533
        %v1535 = vpop.f32.mrf.mxu0
        %v1536 = vpop.f32.mrf.mxu0
        %v1537 = vadd.f32 0.0, %v1536
        %v1538 = vpop.f32.mrf.mxu0
        %1539 = vmatprep.mubr.bf16.mxu0 %v862
        %1540 = vmatmul.mubr.bf16.gmra.mxu0 %v861
        %v1541 = vpop.f32.mrf.mxu0
        %v1542 = vadd.f32 0.0, %v1541
        %v1543 = vpop.f32.mrf.mxu0
        %v1544 = vpop.f32.mrf.mxu0
        %v1545 = vadd.f32 0.0, %v1544
        %v1546 = vpop.f32.mrf.mxu0
        %1547 = vmatprep.mubr.bf16.mxu0 %v864
        %1548 = vmatmul.mubr.bf16.gmra.mxu0 %v863
        %v1549 = vpop.f32.mrf.mxu0
        %v1550 = vadd.f32 0.0, %v1549
        %v1551 = vpop.f32.mrf.mxu0
        %v1552 = vpop.f32.mrf.mxu0
        %v1553 = vadd.f32 0.0, %v1552
        %v1554 = vpop.f32.mrf.mxu0
        %1555 = vmatprep.mubr.bf16.mxu0 %v866
        %1556 = vmatmul.mubr.bf16.gmra.mxu0 %v865
        %v1557 = vpop.f32.mrf.mxu0
        %v1558 = vadd.f32 0.0, %v1557
        %v1559 = vpop.f32.mrf.mxu0
        %v1560 = vpop.f32.mrf.mxu0
        %v1561 = vadd.f32 0.0, %v1560
        %v1562 = vpop.f32.mrf.mxu0
        %1563 = vmatprep.mubr.bf16.mxu0 %v868
        %1564 = vmatmul.mubr.bf16.gmra.mxu0 %v867
        %v1565 = vpop.f32.mrf.mxu0
        %v1566 = vadd.f32 0.0, %v1565
        %v1567 = vpop.f32.mrf.mxu0
        %v1568 = vpop.f32.mrf.mxu0
        %v1569 = vadd.f32 0.0, %v1568
        %v1570 = vpop.f32.mrf.mxu0
        %1571 = vmatprep.mubr.bf16.mxu0 %v870
        %1572 = vmatmul.mubr.bf16.gmra.mxu0 %v869
        %v1573 = vpop.f32.mrf.mxu0
        %v1574 = vadd.f32 0.0, %v1573
        %v1575 = vpop.f32.mrf.mxu0
        %v1576 = vpop.f32.mrf.mxu0
        %v1577 = vadd.f32 0.0, %v1576
        %v1578 = vpop.f32.mrf.mxu0
        %1579 = vmatprep.mubr.bf16.mxu0 %v872
        %1580 = vmatmul.mubr.bf16.gmra.mxu0 %v871
        %v1581 = vpop.f32.mrf.mxu0
        %v1582 = vadd.f32 0.0, %v1581
        %v1583 = vpop.f32.mrf.mxu0
        %v1584 = vpop.f32.mrf.mxu0
        %v1585 = vadd.f32 0.0, %v1584
        %v1586 = vpop.f32.mrf.mxu0
        %1587 = vmatprep.mubr.bf16.mxu0 %v874
        %1588 = vmatmul.mubr.bf16.gmra.mxu0 %v873
        %v1589 = vpop.f32.mrf.mxu0
        %v1590 = vadd.f32 0.0, %v1589
        %v1591 = vpop.f32.mrf.mxu0
        %v1592 = vpop.f32.mrf.mxu0
        %v1593 = vadd.f32 0.0, %v1592
        %v1594 = vpop.f32.mrf.mxu0
        %1595 = vmatprep.mubr.bf16.mxu0 %v876
        %1596 = vmatmul.mubr.bf16.gmra.mxu0 %v875
        %v1597 = vpop.f32.mrf.mxu0
        %v1598 = vadd.f32 0.0, %v1597
        %v1599 = vpop.f32.mrf.mxu0
        %v1600 = vpop.f32.mrf.mxu0
        %v1601 = vadd.f32 0.0, %v1600
        %v1602 = vpop.f32.mrf.mxu0
        %1603 = vmatprep.mubr.bf16.mxu0 %v878
        %1604 = vmatmul.mubr.bf16.gmra.mxu0 %v877
        %v1605 = vpop.f32.mrf.mxu0
        %v1606 = vadd.f32 0.0, %v1605
        %v1607 = vpop.f32.mrf.mxu0
        %v1608 = vpop.f32.mrf.mxu0
        %v1609 = vadd.f32 0.0, %v1608
        %v1610 = vpop.f32.mrf.mxu0
        %1611 = vmatprep.mubr.bf16.mxu0 %v880
        %1612 = vmatmul.mubr.bf16.gmra.mxu0 %v879
        %v1613 = vpop.f32.mrf.mxu0
        %v1614 = vadd.f32 0.0, %v1613
        %v1615 = vpop.f32.mrf.mxu0
        %v1616 = vpop.f32.mrf.mxu0
        %v1617 = vadd.f32 0.0, %v1616
        %v1618 = vpop.f32.mrf.mxu0
        %1619 = vmatprep.mubr.bf16.mxu0 %v882
        %1620 = vmatmul.mubr.bf16.gmra.mxu0 %v881
        %v1621 = vpop.f32.mrf.mxu0
        %v1622 = vadd.f32 0.0, %v1621
        %v1623 = vpop.f32.mrf.mxu0
        %v1624 = vpop.f32.mrf.mxu0
        %v1625 = vadd.f32 0.0, %v1624
        %v1626 = vpop.f32.mrf.mxu0
        %1627 = vmatprep.mubr.bf16.mxu0 %v884
        %1628 = vmatmul.mubr.bf16.gmra.mxu0 %v883
        %v1629 = vpop.f32.mrf.mxu0
        %v1630 = vadd.f32 0.0, %v1629
        %v1631 = vpop.f32.mrf.mxu0
        %v1632 = vpop.f32.mrf.mxu0
        %v1633 = vadd.f32 0.0, %v1632
        %v1634 = vpop.f32.mrf.mxu0
        %1635 = vmatprep.mubr.bf16.mxu0 %v886
        %1636 = vmatmul.mubr.bf16.gmra.mxu0 %v885
        %v1637 = vpop.f32.mrf.mxu0
        %v1638 = vadd.f32 0.0, %v1637
        %v1639 = vpop.f32.mrf.mxu0
        %v1640 = vpop.f32.mrf.mxu0
        %v1641 = vadd.f32 0.0, %v1640
        %v1642 = vpop.f32.mrf.mxu0
        %1643 = vmatprep.mubr.bf16.mxu0 %v888
        %1644 = vmatmul.mubr.bf16.gmra.mxu0 %v887
        %v1645 = vpop.f32.mrf.mxu0
        %v1646 = vadd.f32 0.0, %v1645
        %v1647 = vpop.f32.mrf.mxu0
        %v1648 = vpop.f32.mrf.mxu0
        %v1649 = vadd.f32 0.0, %v1648
        %v1650 = vpop.f32.mrf.mxu0
        %1651 = vmatprep.mubr.bf16.mxu0 %v890
        %1652 = vmatmul.mubr.bf16.gmra.mxu0 %v889
        %v1653 = vpop.f32.mrf.mxu0
        %v1654 = vadd.f32 0.0, %v1653
        %v1655 = vpop.f32.mrf.mxu0
        %v1656 = vpop.f32.mrf.mxu0
        %v1657 = vadd.f32 0.0, %v1656
        %v1658 = vpop.f32.mrf.mxu0
        %1659 = vdwg.mxu0
        %v1660 = vpack.c.bf16 %v1153, %v1150
        %v1661 = vpack.c.bf16 %v1161, %v1158
        %v1662 = vpack.c.bf16 %v1169, %v1166
        %v1663 = vpack.c.bf16 %v1177, %v1174
        %v1664 = vpack.c.bf16 %v1185, %v1182
        %v1665 = vpack.c.bf16 %v1193, %v1190
        %v1666 = vpack.c.bf16 %v1201, %v1198
        %v1667 = vpack.c.bf16 %v1209, %v1206
        %v1668 = vpack.c.bf16 %v1217, %v1214
        %v1669 = vpack.c.bf16 %v1225, %v1222
        %v1670 = vpack.c.bf16 %v1233, %v1230
        %v1671 = vpack.c.bf16 %v1241, %v1238
        %v1672 = vpack.c.bf16 %v1249, %v1246
        %v1673 = vpack.c.bf16 %v1257, %v1254
        %v1674 = vpack.c.bf16 %v1265, %v1262
        %v1675 = vpack.c.bf16 %v1273, %v1270
        %v1676 = vpack.c.bf16 %v1281, %v1278
        %v1677 = vpack.c.bf16 %v1289, %v1286
        %v1678 = vpack.c.bf16 %v1297, %v1294
        %v1679 = vpack.c.bf16 %v1305, %v1302
        %v1680 = vpack.c.bf16 %v1313, %v1310
        %v1681 = vpack.c.bf16 %v1321, %v1318
        %v1682 = vpack.c.bf16 %v1329, %v1326
        %v1683 = vpack.c.bf16 %v1337, %v1334
        %v1684 = vpack.c.bf16 %v1345, %v1342
        %v1685 = vpack.c.bf16 %v1353, %v1350
        %v1686 = vpack.c.bf16 %v1361, %v1358
        %v1687 = vpack.c.bf16 %v1369, %v1366
        %v1688 = vpack.c.bf16 %v1377, %v1374
        %v1689 = vpack.c.bf16 %v1385, %v1382
        %v1690 = vpack.c.bf16 %v1393, %v1390
        %v1691 = vpack.c.bf16 %v1401, %v1398
        %v1692 = vpack.c.bf16 %v1409, %v1406
        %v1693 = vpack.c.bf16 %v1417, %v1414
        %v1694 = vpack.c.bf16 %v1425, %v1422
        %v1695 = vpack.c.bf16 %v1433, %v1430
        %v1696 = vpack.c.bf16 %v1441, %v1438
        %v1697 = vpack.c.bf16 %v1449, %v1446
        %v1698 = vpack.c.bf16 %v1457, %v1454
        %v1699 = vpack.c.bf16 %v1465, %v1462
        %v1700 = vpack.c.bf16 %v1473, %v1470
        %v1701 = vpack.c.bf16 %v1481, %v1478
        %v1702 = vpack.c.bf16 %v1489, %v1486
        %v1703 = vpack.c.bf16 %v1497, %v1494
        %v1704 = vpack.c.bf16 %v1505, %v1502
        %v1705 = vpack.c.bf16 %v1513, %v1510
        %v1706 = vpack.c.bf16 %v1521, %v1518
        %v1707 = vpack.c.bf16 %v1529, %v1526
        %v1708 = vpack.c.bf16 %v1537, %v1534
        %v1709 = vpack.c.bf16 %v1545, %v1542
        %v1710 = vpack.c.bf16 %v1553, %v1550
        %v1711 = vpack.c.bf16 %v1561, %v1558
        %v1712 = vpack.c.bf16 %v1569, %v1566
        %v1713 = vpack.c.bf16 %v1577, %v1574
        %v1714 = vpack.c.bf16 %v1585, %v1582
        %v1715 = vpack.c.bf16 %v1593, %v1590
        %v1716 = vpack.c.bf16 %v1601, %v1598
        %v1717 = vpack.c.bf16 %v1609, %v1606
        %v1718 = vpack.c.bf16 %v1617, %v1614
        %v1719 = vpack.c.bf16 %v1625, %v1622
        %v1720 = vpack.c.bf16 %v1633, %v1630
        %v1721 = vpack.c.bf16 %v1641, %v1638
        %v1722 = vpack.c.bf16 %v1649, %v1646
        %v1723 = vpack.c.bf16 %v1657, %v1654
        %v1788 = vunpack.c.l.b16 %v1660
        %v1789 = vunpack.c.h.b16 %v1660
        %v1790 = vunpack.c.l.b16 %v1661
        %v1791 = vunpack.c.h.b16 %v1661
        %v1792 = vunpack.c.l.b16 %v1662
        %v1793 = vunpack.c.h.b16 %v1662
        %v1794 = vunpack.c.l.b16 %v1663
        %v1795 = vunpack.c.h.b16 %v1663
        %v1796 = vunpack.c.l.b16 %v1664
        %v1797 = vunpack.c.h.b16 %v1664
        %v1798 = vunpack.c.l.b16 %v1665
        %v1799 = vunpack.c.h.b16 %v1665
        %v1800 = vunpack.c.l.b16 %v1666
        %v1801 = vunpack.c.h.b16 %v1666
        %v1802 = vunpack.c.l.b16 %v1667
        %v1803 = vunpack.c.h.b16 %v1667
        %v1804 = vunpack.c.l.b16 %v1668
        %v1805 = vunpack.c.h.b16 %v1668
        %v1806 = vunpack.c.l.b16 %v1669
        %v1807 = vunpack.c.h.b16 %v1669
        %v1808 = vunpack.c.l.b16 %v1670
        %v1809 = vunpack.c.h.b16 %v1670
        %v1810 = vunpack.c.l.b16 %v1671
        %v1811 = vunpack.c.h.b16 %v1671
        %v1812 = vunpack.c.l.b16 %v1672
        %v1813 = vunpack.c.h.b16 %v1672
        %v1814 = vunpack.c.l.b16 %v1673
        %v1815 = vunpack.c.h.b16 %v1673
        %v1816 = vunpack.c.l.b16 %v1674
        %v1817 = vunpack.c.h.b16 %v1674
        %v1818 = vunpack.c.l.b16 %v1675
        %v1819 = vunpack.c.h.b16 %v1675
        %v1820 = vunpack.c.l.b16 %v1676
        %v1821 = vunpack.c.h.b16 %v1676
        %v1822 = vunpack.c.l.b16 %v1677
        %v1823 = vunpack.c.h.b16 %v1677
        %v1824 = vunpack.c.l.b16 %v1678
        %v1825 = vunpack.c.h.b16 %v1678
        %v1826 = vunpack.c.l.b16 %v1679
        %v1827 = vunpack.c.h.b16 %v1679
        %v1828 = vunpack.c.l.b16 %v1680
        %v1829 = vunpack.c.h.b16 %v1680
        %v1830 = vunpack.c.l.b16 %v1681
        %v1831 = vunpack.c.h.b16 %v1681
        %v1832 = vunpack.c.l.b16 %v1682
        %v1833 = vunpack.c.h.b16 %v1682
        %v1834 = vunpack.c.l.b16 %v1683
        %v1835 = vunpack.c.h.b16 %v1683
        %v1836 = vunpack.c.l.b16 %v1684
        %v1837 = vunpack.c.h.b16 %v1684
        %v1838 = vunpack.c.l.b16 %v1685
        %v1839 = vunpack.c.h.b16 %v1685
        %v1840 = vunpack.c.l.b16 %v1686
        %v1841 = vunpack.c.h.b16 %v1686
        %v1842 = vunpack.c.l.b16 %v1687
        %v1843 = vunpack.c.h.b16 %v1687
        %v1844 = vunpack.c.l.b16 %v1688
        %v1845 = vunpack.c.h.b16 %v1688
        %v1846 = vunpack.c.l.b16 %v1689
        %v1847 = vunpack.c.h.b16 %v1689
        %v1848 = vunpack.c.l.b16 %v1690
        %v1849 = vunpack.c.h.b16 %v1690
        %v1850 = vunpack.c.l.b16 %v1691
        %v1851 = vunpack.c.h.b16 %v1691
        %v1852 = vunpack.c.l.b16 %v1692
        %v1853 = vunpack.c.h.b16 %v1692
        %v1854 = vunpack.c.l.b16 %v1693
        %v1855 = vunpack.c.h.b16 %v1693
        %v1856 = vunpack.c.l.b16 %v1694
        %v1857 = vunpack.c.h.b16 %v1694
        %v1858 = vunpack.c.l.b16 %v1695
        %v1859 = vunpack.c.h.b16 %v1695
        %v1860 = vunpack.c.l.b16 %v1696
        %v1861 = vunpack.c.h.b16 %v1696
        %v1862 = vunpack.c.l.b16 %v1697
        %v1863 = vunpack.c.h.b16 %v1697
        %v1864 = vunpack.c.l.b16 %v1698
        %v1865 = vunpack.c.h.b16 %v1698
        %v1866 = vunpack.c.l.b16 %v1699
        %v1867 = vunpack.c.h.b16 %v1699
        %v1868 = vunpack.c.l.b16 %v1700
        %v1869 = vunpack.c.h.b16 %v1700
        %v1870 = vunpack.c.l.b16 %v1701
        %v1871 = vunpack.c.h.b16 %v1701
        %v1872 = vunpack.c.l.b16 %v1702
        %v1873 = vunpack.c.h.b16 %v1702
        %v1874 = vunpack.c.l.b16 %v1703
        %v1875 = vunpack.c.h.b16 %v1703
        %v1876 = vunpack.c.l.b16 %v1704
        %v1877 = vunpack.c.h.b16 %v1704
        %v1878 = vunpack.c.l.b16 %v1705
        %v1879 = vunpack.c.h.b16 %v1705
        %v1880 = vunpack.c.l.b16 %v1706
        %v1881 = vunpack.c.h.b16 %v1706
        %v1882 = vunpack.c.l.b16 %v1707
        %v1883 = vunpack.c.h.b16 %v1707
        %v1884 = vunpack.c.l.b16 %v1708
        %v1885 = vunpack.c.h.b16 %v1708
        %v1886 = vunpack.c.l.b16 %v1709
        %v1887 = vunpack.c.h.b16 %v1709
        %v1888 = vunpack.c.l.b16 %v1710
        %v1889 = vunpack.c.h.b16 %v1710
        %v1890 = vunpack.c.l.b16 %v1711
        %v1891 = vunpack.c.h.b16 %v1711
        %v1892 = vunpack.c.l.b16 %v1712
        %v1893 = vunpack.c.h.b16 %v1712
        %v1894 = vunpack.c.l.b16 %v1713
        %v1895 = vunpack.c.h.b16 %v1713
        %v1896 = vunpack.c.l.b16 %v1714
        %v1897 = vunpack.c.h.b16 %v1714
        %v1898 = vunpack.c.l.b16 %v1715
        %v1899 = vunpack.c.h.b16 %v1715
        %v1900 = vunpack.c.l.b16 %v1716
        %v1901 = vunpack.c.h.b16 %v1716
        %v1902 = vunpack.c.l.b16 %v1717
        %v1903 = vunpack.c.h.b16 %v1717
        %v1904 = vunpack.c.l.b16 %v1718
        %v1905 = vunpack.c.h.b16 %v1718
        %v1906 = vunpack.c.l.b16 %v1719
        %v1907 = vunpack.c.h.b16 %v1719
        %v1908 = vunpack.c.l.b16 %v1720
        %v1909 = vunpack.c.h.b16 %v1720
        %v1910 = vunpack.c.l.b16 %v1721
        %v1911 = vunpack.c.h.b16 %v1721
        %v1912 = vunpack.c.l.b16 %v1722
        %v1913 = vunpack.c.h.b16 %v1722
        %v1914 = vunpack.c.l.b16 %v1723
        %v1915 = vunpack.c.h.b16 %v1723
        %v1916 = vpack.c.b16 %v1788, %v1788
        %v1917 = vpack.c.b16 %v1789, %v1789
        %v1918 = vpack.c.b16 %v1790, %v1790
        %v1919 = vpack.c.b16 %v1791, %v1791
        %v1920 = vpack.c.b16 %v1792, %v1792
        %v1921 = vpack.c.b16 %v1793, %v1793
        %v1922 = vpack.c.b16 %v1794, %v1794
        %v1923 = vpack.c.b16 %v1795, %v1795
        %v1924 = vpack.c.b16 %v1796, %v1796
        %v1925 = vpack.c.b16 %v1797, %v1797
        %v1926 = vpack.c.b16 %v1798, %v1798
        %v1927 = vpack.c.b16 %v1799, %v1799
        %v1928 = vpack.c.b16 %v1800, %v1800
        %v1929 = vpack.c.b16 %v1801, %v1801
        %v1930 = vpack.c.b16 %v1802, %v1802
        %v1931 = vpack.c.b16 %v1803, %v1803
        %v1932 = vpack.c.b16 %v1804, %v1804
        %v1933 = vpack.c.b16 %v1805, %v1805
        %v1934 = vpack.c.b16 %v1806, %v1806
        %v1935 = vpack.c.b16 %v1807, %v1807
        %v1936 = vpack.c.b16 %v1808, %v1808
        %v1937 = vpack.c.b16 %v1809, %v1809
        %v1938 = vpack.c.b16 %v1810, %v1810
        %v1939 = vpack.c.b16 %v1811, %v1811
        %v1940 = vpack.c.b16 %v1812, %v1812
        %v1941 = vpack.c.b16 %v1813, %v1813
        %v1942 = vpack.c.b16 %v1814, %v1814
        %v1943 = vpack.c.b16 %v1815, %v1815
        %v1944 = vpack.c.b16 %v1816, %v1816
        %v1945 = vpack.c.b16 %v1817, %v1817
        %v1946 = vpack.c.b16 %v1818, %v1818
        %v1947 = vpack.c.b16 %v1819, %v1819
        %v1948 = vpack.c.b16 %v1820, %v1820
        %v1949 = vpack.c.b16 %v1821, %v1821
        %v1950 = vpack.c.b16 %v1822, %v1822
        %v1951 = vpack.c.b16 %v1823, %v1823
        %v1952 = vpack.c.b16 %v1824, %v1824
        %v1953 = vpack.c.b16 %v1825, %v1825
        %v1954 = vpack.c.b16 %v1826, %v1826
        %v1955 = vpack.c.b16 %v1827, %v1827
        %v1956 = vpack.c.b16 %v1828, %v1828
        %v1957 = vpack.c.b16 %v1829, %v1829
        %v1958 = vpack.c.b16 %v1830, %v1830
        %v1959 = vpack.c.b16 %v1831, %v1831
        %v1960 = vpack.c.b16 %v1832, %v1832
        %v1961 = vpack.c.b16 %v1833, %v1833
        %v1962 = vpack.c.b16 %v1834, %v1834
        %v1963 = vpack.c.b16 %v1835, %v1835
        %v1964 = vpack.c.b16 %v1836, %v1836
        %v1965 = vpack.c.b16 %v1837, %v1837
        %v1966 = vpack.c.b16 %v1838, %v1838
        %v1967 = vpack.c.b16 %v1839, %v1839
        %v1968 = vpack.c.b16 %v1840, %v1840
        %v1969 = vpack.c.b16 %v1841, %v1841
        %v1970 = vpack.c.b16 %v1842, %v1842
        %v1971 = vpack.c.b16 %v1843, %v1843
        %v1972 = vpack.c.b16 %v1844, %v1844
        %v1973 = vpack.c.b16 %v1845, %v1845
        %v1974 = vpack.c.b16 %v1846, %v1846
        %v1975 = vpack.c.b16 %v1847, %v1847
        %v1976 = vpack.c.b16 %v1848, %v1848
        %v1977 = vpack.c.b16 %v1849, %v1849
        %v1978 = vpack.c.b16 %v1850, %v1850
        %v1979 = vpack.c.b16 %v1851, %v1851
        %v1980 = vpack.c.b16 %v1852, %v1852
        %v1981 = vpack.c.b16 %v1853, %v1853
        %v1982 = vpack.c.b16 %v1854, %v1854
        %v1983 = vpack.c.b16 %v1855, %v1855
        %v1984 = vpack.c.b16 %v1856, %v1856
        %v1985 = vpack.c.b16 %v1857, %v1857
        %v1986 = vpack.c.b16 %v1858, %v1858
        %v1987 = vpack.c.b16 %v1859, %v1859
        %v1988 = vpack.c.b16 %v1860, %v1860
        %v1989 = vpack.c.b16 %v1861, %v1861
        %v1990 = vpack.c.b16 %v1862, %v1862
        %v1991 = vpack.c.b16 %v1863, %v1863
        %v1992 = vpack.c.b16 %v1864, %v1864
        %v1993 = vpack.c.b16 %v1865, %v1865
        %v1994 = vpack.c.b16 %v1866, %v1866
        %v1995 = vpack.c.b16 %v1867, %v1867
        %v1996 = vpack.c.b16 %v1868, %v1868
        %v1997 = vpack.c.b16 %v1869, %v1869
        %v1998 = vpack.c.b16 %v1870, %v1870
        %v1999 = vpack.c.b16 %v1871, %v1871
        %v2000 = vpack.c.b16 %v1872, %v1872
        %v2001 = vpack.c.b16 %v1873, %v1873
        %v2002 = vpack.c.b16 %v1874, %v1874
        %v2003 = vpack.c.b16 %v1875, %v1875
        %v2004 = vpack.c.b16 %v1876, %v1876
        %v2005 = vpack.c.b16 %v1877, %v1877
        %v2006 = vpack.c.b16 %v1878, %v1878
        %v2007 = vpack.c.b16 %v1879, %v1879
        %v2008 = vpack.c.b16 %v1880, %v1880
        %v2009 = vpack.c.b16 %v1881, %v1881
        %v2010 = vpack.c.b16 %v1882, %v1882
        %v2011 = vpack.c.b16 %v1883, %v1883
        %v2012 = vpack.c.b16 %v1884, %v1884
        %v2013 = vpack.c.b16 %v1885, %v1885
        %v2014 = vpack.c.b16 %v1886, %v1886
        %v2015 = vpack.c.b16 %v1887, %v1887
        %v2016 = vpack.c.b16 %v1888, %v1888
        %v2017 = vpack.c.b16 %v1889, %v1889
        %v2018 = vpack.c.b16 %v1890, %v1890
        %v2019 = vpack.c.b16 %v1891, %v1891
        %v2020 = vpack.c.b16 %v1892, %v1892
        %v2021 = vpack.c.b16 %v1893, %v1893
        %v2022 = vpack.c.b16 %v1894, %v1894
        %v2023 = vpack.c.b16 %v1895, %v1895
        %v2024 = vpack.c.b16 %v1896, %v1896
        %v2025 = vpack.c.b16 %v1897, %v1897
        %v2026 = vpack.c.b16 %v1898, %v1898
        %v2027 = vpack.c.b16 %v1899, %v1899
        %v2028 = vpack.c.b16 %v1900, %v1900
        %v2029 = vpack.c.b16 %v1901, %v1901
        %v2030 = vpack.c.b16 %v1902, %v1902
        %v2031 = vpack.c.b16 %v1903, %v1903
        %v2032 = vpack.c.b16 %v1904, %v1904
        %v2033 = vpack.c.b16 %v1905, %v1905
        %v2034 = vpack.c.b16 %v1906, %v1906
        %v2035 = vpack.c.b16 %v1907, %v1907
        %v2036 = vpack.c.b16 %v1908, %v1908
        %v2037 = vpack.c.b16 %v1909, %v1909
        %v2038 = vpack.c.b16 %v1910, %v1910
        %v2039 = vpack.c.b16 %v1911, %v1911
        %v2040 = vpack.c.b16 %v1912, %v1912
        %v2041 = vpack.c.b16 %v1913, %v1913
        %v2042 = vpack.c.b16 %v1914, %v1914
        %v2043 = vpack.c.b16 %v1915, %v1915
        %2172 = vst [vmem:[%s208] sm:$0xf] %v1916
        %2173 = vst [vmem:[%s208 + $0x4] sm:$0xf] %v1917
        %2174 = vst [vmem:[%s208 + $0x8] sm:$0xf] %v1918
        %2175 = vst [vmem:[%s208 + $0xc] sm:$0xf] %v1919
        %2176 = vst [vmem:[%s208 + $0x10] sm:$0xf] %v1920
        %2177 = vst [vmem:[%s208 + $0x14] sm:$0xf] %v1921
        %2178 = vst [vmem:[%s208 + $0x18] sm:$0xf] %v1922
        %2179 = vst [vmem:[%s208 + $0x1c] sm:$0xf] %v1923
        %2180 = vst [vmem:[%s208 + $0x20] sm:$0xf] %v1924
        %2181 = vst [vmem:[%s208 + $0x24] sm:$0xf] %v1925
        %2182 = vst [vmem:[%s208 + $0x28] sm:$0xf] %v1926
        %2183 = vst [vmem:[%s208 + $0x2c] sm:$0xf] %v1927
        %2184 = vst [vmem:[%s208 + $0x30] sm:$0xf] %v1928
        %2185 = vst [vmem:[%s208 + $0x34] sm:$0xf] %v1929
        %2186 = vst [vmem:[%s208 + $0x38] sm:$0xf] %v1930
        %2187 = vst [vmem:[%s208 + $0x3c] sm:$0xf] %v1931
        %2188 = vst [vmem:[%s208 + $0x40] sm:$0xf] %v1932
        %2189 = vst [vmem:[%s208 + $0x44] sm:$0xf] %v1933
        %2190 = vst [vmem:[%s208 + $0x48] sm:$0xf] %v1934
        %2191 = vst [vmem:[%s208 + $0x4c] sm:$0xf] %v1935
        %2192 = vst [vmem:[%s208 + $0x50] sm:$0xf] %v1936
        %2193 = vst [vmem:[%s208 + $0x54] sm:$0xf] %v1937
        %2194 = vst [vmem:[%s208 + $0x58] sm:$0xf] %v1938
        %2195 = vst [vmem:[%s208 + $0x5c] sm:$0xf] %v1939
        %2196 = vst [vmem:[%s208 + $0x60] sm:$0xf] %v1940
        %2197 = vst [vmem:[%s208 + $0x64] sm:$0xf] %v1941
        %2198 = vst [vmem:[%s208 + $0x68] sm:$0xf] %v1942
        %2199 = vst [vmem:[%s208 + $0x6c] sm:$0xf] %v1943
        %2200 = vst [vmem:[%s208 + $0x70] sm:$0xf] %v1944
        %2201 = vst [vmem:[%s208 + $0x74] sm:$0xf] %v1945
        %2202 = vst [vmem:[%s208 + $0x78] sm:$0xf] %v1946
        %2203 = vst [vmem:[%s208 + $0x7c] sm:$0xf] %v1947
        %2204 = vst [vmem:[%s208 + $0x80] sm:$0xf] %v1948
        %2205 = vst [vmem:[%s208 + $0x84] sm:$0xf] %v1949
        %2206 = vst [vmem:[%s208 + $0x88] sm:$0xf] %v1950
        %2207 = vst [vmem:[%s208 + $0x8c] sm:$0xf] %v1951
        %2208 = vst [vmem:[%s208 + $0x90] sm:$0xf] %v1952
        %2209 = vst [vmem:[%s208 + $0x94] sm:$0xf] %v1953
        %2210 = vst [vmem:[%s208 + $0x98] sm:$0xf] %v1954
        %2211 = vst [vmem:[%s208 + $0x9c] sm:$0xf] %v1955
        %2212 = vst [vmem:[%s208 + $0xa0] sm:$0xf] %v1956
        %2213 = vst [vmem:[%s208 + $0xa4] sm:$0xf] %v1957
        %2214 = vst [vmem:[%s208 + $0xa8] sm:$0xf] %v1958
        %2215 = vst [vmem:[%s208 + $0xac] sm:$0xf] %v1959
        %2216 = vst [vmem:[%s208 + $0xb0] sm:$0xf] %v1960
        %2217 = vst [vmem:[%s208 + $0xb4] sm:$0xf] %v1961
        %2218 = vst [vmem:[%s208 + $0xb8] sm:$0xf] %v1962
        %2219 = vst [vmem:[%s208 + $0xbc] sm:$0xf] %v1963
        %2220 = vst [vmem:[%s208 + $0xc0] sm:$0xf] %v1964
        %2221 = vst [vmem:[%s208 + $0xc4] sm:$0xf] %v1965
        %2222 = vst [vmem:[%s208 + $0xc8] sm:$0xf] %v1966
        %2223 = vst [vmem:[%s208 + $0xcc] sm:$0xf] %v1967
        %2224 = vst [vmem:[%s208 + $0xd0] sm:$0xf] %v1968
        %2225 = vst [vmem:[%s208 + $0xd4] sm:$0xf] %v1969
        %2226 = vst [vmem:[%s208 + $0xd8] sm:$0xf] %v1970
        %2227 = vst [vmem:[%s208 + $0xdc] sm:$0xf] %v1971
        %2228 = vst [vmem:[%s208 + $0xe0] sm:$0xf] %v1972
        %2229 = vst [vmem:[%s208 + $0xe4] sm:$0xf] %v1973
        %2230 = vst [vmem:[%s208 + $0xe8] sm:$0xf] %v1974
        %2231 = vst [vmem:[%s208 + $0xec] sm:$0xf] %v1975
        %2232 = vst [vmem:[%s208 + $0xf0] sm:$0xf] %v1976
        %2233 = vst [vmem:[%s208 + $0xf4] sm:$0xf] %v1977
        %2234 = vst [vmem:[%s208 + $0xf8] sm:$0xf] %v1978
        %2235 = vst [vmem:[%s208 + $0xfc] sm:$0xf] %v1979
        %2236 = vst [vmem:[%s208 + $0x100] sm:$0xf] %v1980
        %2237 = vst [vmem:[%s208 + $0x104] sm:$0xf] %v1981
        %2238 = vst [vmem:[%s208 + $0x108] sm:$0xf] %v1982
        %2239 = vst [vmem:[%s208 + $0x10c] sm:$0xf] %v1983
        %2240 = vst [vmem:[%s208 + $0x110] sm:$0xf] %v1984
        %2241 = vst [vmem:[%s208 + $0x114] sm:$0xf] %v1985
        %2242 = vst [vmem:[%s208 + $0x118] sm:$0xf] %v1986
        %2243 = vst [vmem:[%s208 + $0x11c] sm:$0xf] %v1987
        %2244 = vst [vmem:[%s208 + $0x120] sm:$0xf] %v1988
        %2245 = vst [vmem:[%s208 + $0x124] sm:$0xf] %v1989
        %2246 = vst [vmem:[%s208 + $0x128] sm:$0xf] %v1990
        %2247 = vst [vmem:[%s208 + $0x12c] sm:$0xf] %v1991
        %2248 = vst [vmem:[%s208 + $0x130] sm:$0xf] %v1992
        %2249 = vst [vmem:[%s208 + $0x134] sm:$0xf] %v1993
        %2250 = vst [vmem:[%s208 + $0x138] sm:$0xf] %v1994
        %2251 = vst [vmem:[%s208 + $0x13c] sm:$0xf] %v1995
        %2252 = vst [vmem:[%s208 + $0x140] sm:$0xf] %v1996
        %2253 = vst [vmem:[%s208 + $0x144] sm:$0xf] %v1997
        %2254 = vst [vmem:[%s208 + $0x148] sm:$0xf] %v1998
        %2255 = vst [vmem:[%s208 + $0x14c] sm:$0xf] %v1999
        %2256 = vst [vmem:[%s208 + $0x150] sm:$0xf] %v2000
        %2257 = vst [vmem:[%s208 + $0x154] sm:$0xf] %v2001
        %2258 = vst [vmem:[%s208 + $0x158] sm:$0xf] %v2002
        %2259 = vst [vmem:[%s208 + $0x15c] sm:$0xf] %v2003
        %2260 = vst [vmem:[%s208 + $0x160] sm:$0xf] %v2004
        %2261 = vst [vmem:[%s208 + $0x164] sm:$0xf] %v2005
        %2262 = vst [vmem:[%s208 + $0x168] sm:$0xf] %v2006
        %2263 = vst [vmem:[%s208 + $0x16c] sm:$0xf] %v2007
        %2264 = vst [vmem:[%s208 + $0x170] sm:$0xf] %v2008
        %2265 = vst [vmem:[%s208 + $0x174] sm:$0xf] %v2009
        %2266 = vst [vmem:[%s208 + $0x178] sm:$0xf] %v2010
        %2267 = vst [vmem:[%s208 + $0x17c] sm:$0xf] %v2011
        %2268 = vst [vmem:[%s208 + $0x180] sm:$0xf] %v2012
        %2269 = vst [vmem:[%s208 + $0x184] sm:$0xf] %v2013
        %2270 = vst [vmem:[%s208 + $0x188] sm:$0xf] %v2014
        %2271 = vst [vmem:[%s208 + $0x18c] sm:$0xf] %v2015
        %2272 = vst [vmem:[%s208 + $0x190] sm:$0xf] %v2016
        %2273 = vst [vmem:[%s208 + $0x194] sm:$0xf] %v2017
        %2274 = vst [vmem:[%s208 + $0x198] sm:$0xf] %v2018
        %2275 = vst [vmem:[%s208 + $0x19c] sm:$0xf] %v2019
        %2276 = vst [vmem:[%s208 + $0x1a0] sm:$0xf] %v2020
        %2277 = vst [vmem:[%s208 + $0x1a4] sm:$0xf] %v2021
        %2278 = vst [vmem:[%s208 + $0x1a8] sm:$0xf] %v2022
        %2279 = vst [vmem:[%s208 + $0x1ac] sm:$0xf] %v2023
        %2280 = vst [vmem:[%s208 + $0x1b0] sm:$0xf] %v2024
        %2281 = vst [vmem:[%s208 + $0x1b4] sm:$0xf] %v2025
        %2282 = vst [vmem:[%s208 + $0x1b8] sm:$0xf] %v2026
        %2283 = vst [vmem:[%s208 + $0x1bc] sm:$0xf] %v2027
        %2284 = vst [vmem:[%s208 + $0x1c0] sm:$0xf] %v2028
        %2285 = vst [vmem:[%s208 + $0x1c4] sm:$0xf] %v2029
        %2286 = vst [vmem:[%s208 + $0x1c8] sm:$0xf] %v2030
        %2287 = vst [vmem:[%s208 + $0x1cc] sm:$0xf] %v2031
        %2288 = vst [vmem:[%s208 + $0x1d0] sm:$0xf] %v2032
        %2289 = vst [vmem:[%s208 + $0x1d4] sm:$0xf] %v2033
        %2290 = vst [vmem:[%s208 + $0x1d8] sm:$0xf] %v2034
        %2291 = vst [vmem:[%s208 + $0x1dc] sm:$0xf] %v2035
        %2292 = vst [vmem:[%s208 + $0x1e0] sm:$0xf] %v2036
        %2293 = vst [vmem:[%s208 + $0x1e4] sm:$0xf] %v2037
        %2294 = vst [vmem:[%s208 + $0x1e8] sm:$0xf] %v2038
        %2295 = vst [vmem:[%s208 + $0x1ec] sm:$0xf] %v2039
        %2296 = vst [vmem:[%s208 + $0x1f0] sm:$0xf] %v2040
        %2297 = vst [vmem:[%s208 + $0x1f4] sm:$0xf] %v2041
        %2298 = vst [vmem:[%s208 + $0x1f8] sm:$0xf] %v2042
        %2299 = vst [vmem:[%s208 + $0x1fc] sm:$0xf] %v2043
        %v2300 = vadd.f32 %v1150, %v1153
        %v2301 = vadd.f32 %v2300, %v1158
        %v2302 = vadd.f32 %v2301, %v1161
        %v2303 = vadd.f32 %v2302, %v1166
        %v2304 = vadd.f32 %v2303, %v1169
        %v2305 = vadd.f32 %v2304, %v1174
        %v2306 = vadd.f32 %v2305, %v1177
        %v2307 = vadd.f32 %v2306, %v1182
        %v2308 = vadd.f32 %v2307, %v1185
        %v2309 = vadd.f32 %v2308, %v1190
        %v2310 = vadd.f32 %v2309, %v1193
        %v2311 = vadd.f32 %v2310, %v1198
        %v2312 = vadd.f32 %v2311, %v1201
        %v2313 = vadd.f32 %v2312, %v1206
        %v2314 = vadd.f32 %v2313, %v1209
        %v2315 = vadd.f32 %v2314, %v1214
        %v2316 = vadd.f32 %v2315, %v1217
        %v2317 = vadd.f32 %v2316, %v1222
        %v2318 = vadd.f32 %v2317, %v1225
        %v2319 = vadd.f32 %v2318, %v1230
        %v2320 = vadd.f32 %v2319, %v1233
        %v2321 = vadd.f32 %v2320, %v1238
        %v2322 = vadd.f32 %v2321, %v1241
        %v2323 = vadd.f32 %v2322, %v1246
        %v2324 = vadd.f32 %v2323, %v1249
        %v2325 = vadd.f32 %v2324, %v1254
        %v2326 = vadd.f32 %v2325, %v1257
        %v2327 = vadd.f32 %v2326, %v1262
        %v2328 = vadd.f32 %v2327, %v1265
        %v2329 = vadd.f32 %v2328, %v1270
        %v2330 = vadd.f32 %v2329, %v1273
        %v2331 = vadd.f32 %v2330, %v1278
        %v2332 = vadd.f32 %v2331, %v1281
        %v2333 = vadd.f32 %v2332, %v1286
        %v2334 = vadd.f32 %v2333, %v1289
        %v2335 = vadd.f32 %v2334, %v1294
        %v2336 = vadd.f32 %v2335, %v1297
        %v2337 = vadd.f32 %v2336, %v1302
        %v2338 = vadd.f32 %v2337, %v1305
        %v2339 = vadd.f32 %v2338, %v1310
        %v2340 = vadd.f32 %v2339, %v1313
        %v2341 = vadd.f32 %v2340, %v1318
        %v2342 = vadd.f32 %v2341, %v1321
        %v2343 = vadd.f32 %v2342, %v1326
        %v2344 = vadd.f32 %v2343, %v1329
        %v2345 = vadd.f32 %v2344, %v1334
        %v2346 = vadd.f32 %v2345, %v1337
        %v2347 = vadd.f32 %v2346, %v1342
        %v2348 = vadd.f32 %v2347, %v1345
        %v2349 = vadd.f32 %v2348, %v1350
        %v2350 = vadd.f32 %v2349, %v1353
        %v2351 = vadd.f32 %v2350, %v1358
        %v2352 = vadd.f32 %v2351, %v1361
        %v2353 = vadd.f32 %v2352, %v1366
        %v2354 = vadd.f32 %v2353, %v1369
        %v2355 = vadd.f32 %v2354, %v1374
        %v2356 = vadd.f32 %v2355, %v1377
        %v2357 = vadd.f32 %v2356, %v1382
        %v2358 = vadd.f32 %v2357, %v1385
        %v2359 = vadd.f32 %v2358, %v1390
        %v2360 = vadd.f32 %v2359, %v1393
        %v2361 = vadd.f32 %v2360, %v1398
        %v2362 = vadd.f32 %v2361, %v1401
        %v2363 = vadd.f32 %v2362, %v1406
        %v2364 = vadd.f32 %v2363, %v1409
        %v2365 = vadd.f32 %v2364, %v1414
        %v2366 = vadd.f32 %v2365, %v1417
        %v2367 = vadd.f32 %v2366, %v1422
        %v2368 = vadd.f32 %v2367, %v1425
        %v2369 = vadd.f32 %v2368, %v1430
        %v2370 = vadd.f32 %v2369, %v1433
        %v2371 = vadd.f32 %v2370, %v1438
        %v2372 = vadd.f32 %v2371, %v1441
        %v2373 = vadd.f32 %v2372, %v1446
        %v2374 = vadd.f32 %v2373, %v1449
        %v2375 = vadd.f32 %v2374, %v1454
        %v2376 = vadd.f32 %v2375, %v1457
        %v2377 = vadd.f32 %v2376, %v1462
        %v2378 = vadd.f32 %v2377, %v1465
        %v2379 = vadd.f32 %v2378, %v1470
        %v2380 = vadd.f32 %v2379, %v1473
        %v2381 = vadd.f32 %v2380, %v1478
        %v2382 = vadd.f32 %v2381, %v1481
        %v2383 = vadd.f32 %v2382, %v1486
        %v2384 = vadd.f32 %v2383, %v1489
        %v2385 = vadd.f32 %v2384, %v1494
        %v2386 = vadd.f32 %v2385, %v1497
        %v2387 = vadd.f32 %v2386, %v1502
        %v2388 = vadd.f32 %v2387, %v1505
        %v2389 = vadd.f32 %v2388, %v1510
        %v2390 = vadd.f32 %v2389, %v1513
        %v2391 = vadd.f32 %v2390, %v1518
        %v2392 = vadd.f32 %v2391, %v1521
        %v2393 = vadd.f32 %v2392, %v1526
        %v2394 = vadd.f32 %v2393, %v1529
        %v2395 = vadd.f32 %v2394, %v1534
        %v2396 = vadd.f32 %v2395, %v1537
        %v2397 = vadd.f32 %v2396, %v1542
        %v2398 = vadd.f32 %v2397, %v1545
        %v2399 = vadd.f32 %v2398, %v1550
        %v2400 = vadd.f32 %v2399, %v1553
        %v2401 = vadd.f32 %v2400, %v1558
        %v2402 = vadd.f32 %v2401, %v1561
        %v2403 = vadd.f32 %v2402, %v1566
        %v2404 = vadd.f32 %v2403, %v1569
        %v2405 = vadd.f32 %v2404, %v1574
        %v2406 = vadd.f32 %v2405, %v1577
        %v2407 = vadd.f32 %v2406, %v1582
        %v2408 = vadd.f32 %v2407, %v1585
        %v2409 = vadd.f32 %v2408, %v1590
        %v2410 = vadd.f32 %v2409, %v1593
        %v2411 = vadd.f32 %v2410, %v1598
        %v2412 = vadd.f32 %v2411, %v1601
        %v2413 = vadd.f32 %v2412, %v1606
        %v2414 = vadd.f32 %v2413, %v1609
        %v2415 = vadd.f32 %v2414, %v1614
        %v2416 = vadd.f32 %v2415, %v1617
        %v2417 = vadd.f32 %v2416, %v1622
        %v2418 = vadd.f32 %v2417, %v1625
        %v2419 = vadd.f32 %v2418, %v1630
        %v2420 = vadd.f32 %v2419, %v1633
        %v2421 = vadd.f32 %v2420, %v1638
        %v2422 = vadd.f32 %v2421, %v1641
        %v2423 = vadd.f32 %v2422, %v1646
        %v2424 = vadd.f32 %v2423, %v1649
        %v2425 = vadd.f32 %v2424, %v1654
        %v2426 = vadd.f32 %v2425, %v1657
        %v2427 = vrot.slane %v2426, 4
        %v2428 = vadd.f32 %v2426, %v2427
        %v2429 = vrot.slane %v2428, 2
        %v2430 = vadd.f32 %v2428, %v2429
        %v2431 = vrot.slane %v2430, 1
        %v2432 = vadd.f32 %v2430, %v2431
        %v2433 = vmul.f32 %v1150, %v1150
        %v2434 = vmul.f32 %v1153, %v1153
        %v2435 = vmul.f32 %v1158, %v1158
        %v2436 = vmul.f32 %v1161, %v1161
        %v2437 = vmul.f32 %v1166, %v1166
        %v2438 = vmul.f32 %v1169, %v1169
        %v2439 = vmul.f32 %v1174, %v1174
        %v2440 = vmul.f32 %v1177, %v1177
        %v2441 = vmul.f32 %v1182, %v1182
        %v2442 = vmul.f32 %v1185, %v1185
        %v2443 = vmul.f32 %v1190, %v1190
        %v2444 = vmul.f32 %v1193, %v1193
        %v2445 = vmul.f32 %v1198, %v1198
        %v2446 = vmul.f32 %v1201, %v1201
        %v2447 = vmul.f32 %v1206, %v1206
        %v2448 = vmul.f32 %v1209, %v1209
        %v2449 = vmul.f32 %v1214, %v1214
        %v2450 = vmul.f32 %v1217, %v1217
        %v2451 = vmul.f32 %v1222, %v1222
        %v2452 = vmul.f32 %v1225, %v1225
        %v2453 = vmul.f32 %v1230, %v1230
        %v2454 = vmul.f32 %v1233, %v1233
        %v2455 = vmul.f32 %v1238, %v1238
        %v2456 = vmul.f32 %v1241, %v1241
        %v2457 = vmul.f32 %v1246, %v1246
        %v2458 = vmul.f32 %v1249, %v1249
        %v2459 = vmul.f32 %v1254, %v1254
        %v2460 = vmul.f32 %v1257, %v1257
        %v2461 = vmul.f32 %v1262, %v1262
        %v2462 = vmul.f32 %v1265, %v1265
        %v2463 = vmul.f32 %v1270, %v1270
        %v2464 = vmul.f32 %v1273, %v1273
        %v2465 = vmul.f32 %v1278, %v1278
        %v2466 = vmul.f32 %v1281, %v1281
        %v2467 = vmul.f32 %v1286, %v1286
        %v2468 = vmul.f32 %v1289, %v1289
        %v2469 = vmul.f32 %v1294, %v1294
        %v2470 = vmul.f32 %v1297, %v1297
        %v2471 = vmul.f32 %v1302, %v1302
        %v2472 = vmul.f32 %v1305, %v1305
        %v2473 = vmul.f32 %v1310, %v1310
        %v2474 = vmul.f32 %v1313, %v1313
        %v2475 = vmul.f32 %v1318, %v1318
        %v2476 = vmul.f32 %v1321, %v1321
        %v2477 = vmul.f32 %v1326, %v1326
        %v2478 = vmul.f32 %v1329, %v1329
        %v2479 = vmul.f32 %v1334, %v1334
        %v2480 = vmul.f32 %v1337, %v1337
        %v2481 = vmul.f32 %v1342, %v1342
        %v2482 = vmul.f32 %v1345, %v1345
        %v2483 = vmul.f32 %v1350, %v1350
        %v2484 = vmul.f32 %v1353, %v1353
        %v2485 = vmul.f32 %v1358, %v1358
        %v2486 = vmul.f32 %v1361, %v1361
        %v2487 = vmul.f32 %v1366, %v1366
        %v2488 = vmul.f32 %v1369, %v1369
        %v2489 = vmul.f32 %v1374, %v1374
        %v2490 = vmul.f32 %v1377, %v1377
        %v2491 = vmul.f32 %v1382, %v1382
        %v2492 = vmul.f32 %v1385, %v1385
        %v2493 = vmul.f32 %v1390, %v1390
        %v2494 = vmul.f32 %v1393, %v1393
        %v2495 = vmul.f32 %v1398, %v1398
        %v2496 = vmul.f32 %v1401, %v1401
        %v2497 = vmul.f32 %v1406, %v1406
        %v2498 = vmul.f32 %v1409, %v1409
        %v2499 = vmul.f32 %v1414, %v1414
        %v2500 = vmul.f32 %v1417, %v1417
        %v2501 = vmul.f32 %v1422, %v1422
        %v2502 = vmul.f32 %v1425, %v1425
        %v2503 = vmul.f32 %v1430, %v1430
        %v2504 = vmul.f32 %v1433, %v1433
        %v2505 = vmul.f32 %v1438, %v1438
        %v2506 = vmul.f32 %v1441, %v1441
        %v2507 = vmul.f32 %v1446, %v1446
        %v2508 = vmul.f32 %v1449, %v1449
        %v2509 = vmul.f32 %v1454, %v1454
        %v2510 = vmul.f32 %v1457, %v1457
        %v2511 = vmul.f32 %v1462, %v1462
        %v2512 = vmul.f32 %v1465, %v1465
        %v2513 = vmul.f32 %v1470, %v1470
        %v2514 = vmul.f32 %v1473, %v1473
        %v2515 = vmul.f32 %v1478, %v1478
        %v2516 = vmul.f32 %v1481, %v1481
        %v2517 = vmul.f32 %v1486, %v1486
        %v2518 = vmul.f32 %v1489, %v1489
        %v2519 = vmul.f32 %v1494, %v1494
        %v2520 = vmul.f32 %v1497, %v1497
        %v2521 = vmul.f32 %v1502, %v1502
        %v2522 = vmul.f32 %v1505, %v1505
        %v2523 = vmul.f32 %v1510, %v1510
        %v2524 = vmul.f32 %v1513, %v1513
        %v2525 = vmul.f32 %v1518, %v1518
        %v2526 = vmul.f32 %v1521, %v1521
        %v2527 = vmul.f32 %v1526, %v1526
        %v2528 = vmul.f32 %v1529, %v1529
        %v2529 = vmul.f32 %v1534, %v1534
        %v2530 = vmul.f32 %v1537, %v1537
        %v2531 = vmul.f32 %v1542, %v1542
        %v2532 = vmul.f32 %v1545, %v1545
        %v2533 = vmul.f32 %v1550, %v1550
        %v2534 = vmul.f32 %v1553, %v1553
        %v2535 = vmul.f32 %v1558, %v1558
        %v2536 = vmul.f32 %v1561, %v1561
        %v2537 = vmul.f32 %v1566, %v1566
        %v2538 = vmul.f32 %v1569, %v1569
        %v2539 = vmul.f32 %v1574, %v1574
        %v2540 = vmul.f32 %v1577, %v1577
        %v2541 = vmul.f32 %v1582, %v1582
        %v2542 = vmul.f32 %v1585, %v1585
        %v2543 = vmul.f32 %v1590, %v1590
        %v2544 = vmul.f32 %v1593, %v1593
        %v2545 = vmul.f32 %v1598, %v1598
        %v2546 = vmul.f32 %v1601, %v1601
        %v2547 = vmul.f32 %v1606, %v1606
        %v2548 = vmul.f32 %v1609, %v1609
        %v2549 = vmul.f32 %v1614, %v1614
        %v2550 = vmul.f32 %v1617, %v1617
        %v2551 = vmul.f32 %v1622, %v1622
        %v2552 = vmul.f32 %v1625, %v1625
        %v2553 = vmul.f32 %v1630, %v1630
        %v2554 = vmul.f32 %v1633, %v1633
        %v2555 = vmul.f32 %v1638, %v1638
        %v2556 = vmul.f32 %v1641, %v1641
        %v2557 = vmul.f32 %v1646, %v1646
        %v2558 = vmul.f32 %v1649, %v1649
        %v2559 = vmul.f32 %v1654, %v1654
        %v2560 = vmul.f32 %v1657, %v1657
        %v2561 = vadd.f32 %v2433, %v2434
        %v2562 = vadd.f32 %v2561, %v2435
        %v2563 = vadd.f32 %v2562, %v2436
        %v2564 = vadd.f32 %v2563, %v2437
        %v2565 = vadd.f32 %v2564, %v2438
        %v2566 = vadd.f32 %v2565, %v2439
        %v2567 = vadd.f32 %v2566, %v2440
        %v2568 = vadd.f32 %v2567, %v2441
        %v2569 = vadd.f32 %v2568, %v2442
        %v2570 = vadd.f32 %v2569, %v2443
        %v2571 = vadd.f32 %v2570, %v2444
        %v2572 = vadd.f32 %v2571, %v2445
        %v2573 = vadd.f32 %v2572, %v2446
        %v2574 = vadd.f32 %v2573, %v2447
        %v2575 = vadd.f32 %v2574, %v2448
        %v2576 = vadd.f32 %v2575, %v2449
        %v2577 = vadd.f32 %v2576, %v2450
        %v2578 = vadd.f32 %v2577, %v2451
        %v2579 = vadd.f32 %v2578, %v2452
        %v2580 = vadd.f32 %v2579, %v2453
        %v2581 = vadd.f32 %v2580, %v2454
        %v2582 = vadd.f32 %v2581, %v2455
        %v2583 = vadd.f32 %v2582, %v2456
        %v2584 = vadd.f32 %v2583, %v2457
        %v2585 = vadd.f32 %v2584, %v2458
        %v2586 = vadd.f32 %v2585, %v2459
        %v2587 = vadd.f32 %v2586, %v2460
        %v2588 = vadd.f32 %v2587, %v2461
        %v2589 = vadd.f32 %v2588, %v2462
        %v2590 = vadd.f32 %v2589, %v2463
        %v2591 = vadd.f32 %v2590, %v2464
        %v2592 = vadd.f32 %v2591, %v2465
        %v2593 = vadd.f32 %v2592, %v2466
        %v2594 = vadd.f32 %v2593, %v2467
        %v2595 = vadd.f32 %v2594, %v2468
        %v2596 = vadd.f32 %v2595, %v2469
        %v2597 = vadd.f32 %v2596, %v2470
        %v2598 = vadd.f32 %v2597, %v2471
        %v2599 = vadd.f32 %v2598, %v2472
        %v2600 = vadd.f32 %v2599, %v2473
        %v2601 = vadd.f32 %v2600, %v2474
        %v2602 = vadd.f32 %v2601, %v2475
        %v2603 = vadd.f32 %v2602, %v2476
        %v2604 = vadd.f32 %v2603, %v2477
        %v2605 = vadd.f32 %v2604, %v2478
        %v2606 = vadd.f32 %v2605, %v2479
        %v2607 = vadd.f32 %v2606, %v2480
        %v2608 = vadd.f32 %v2607, %v2481
        %v2609 = vadd.f32 %v2608, %v2482
        %v2610 = vadd.f32 %v2609, %v2483
        %v2611 = vadd.f32 %v2610, %v2484
        %v2612 = vadd.f32 %v2611, %v2485
        %v2613 = vadd.f32 %v2612, %v2486
        %v2614 = vadd.f32 %v2613, %v2487
        %v2615 = vadd.f32 %v2614, %v2488
        %v2616 = vadd.f32 %v2615, %v2489
        %v2617 = vadd.f32 %v2616, %v2490
        %v2618 = vadd.f32 %v2617, %v2491
        %v2619 = vadd.f32 %v2618, %v2492
        %v2620 = vadd.f32 %v2619, %v2493
        %v2621 = vadd.f32 %v2620, %v2494
        %v2622 = vadd.f32 %v2621, %v2495
        %v2623 = vadd.f32 %v2622, %v2496
        %v2624 = vadd.f32 %v2623, %v2497
        %v2625 = vadd.f32 %v2624, %v2498
        %v2626 = vadd.f32 %v2625, %v2499
        %v2627 = vadd.f32 %v2626, %v2500
        %v2628 = vadd.f32 %v2627, %v2501
        %v2629 = vadd.f32 %v2628, %v2502
        %v2630 = vadd.f32 %v2629, %v2503
        %v2631 = vadd.f32 %v2630, %v2504
        %v2632 = vadd.f32 %v2631, %v2505
        %v2633 = vadd.f32 %v2632, %v2506
        %v2634 = vadd.f32 %v2633, %v2507
        %v2635 = vadd.f32 %v2634, %v2508
        %v2636 = vadd.f32 %v2635, %v2509
        %v2637 = vadd.f32 %v2636, %v2510
        %v2638 = vadd.f32 %v2637, %v2511
        %v2639 = vadd.f32 %v2638, %v2512
        %v2640 = vadd.f32 %v2639, %v2513
        %v2641 = vadd.f32 %v2640, %v2514
        %v2642 = vadd.f32 %v2641, %v2515
        %v2643 = vadd.f32 %v2642, %v2516
        %v2644 = vadd.f32 %v2643, %v2517
        %v2645 = vadd.f32 %v2644, %v2518
        %v2646 = vadd.f32 %v2645, %v2519
        %v2647 = vadd.f32 %v2646, %v2520
        %v2648 = vadd.f32 %v2647, %v2521
        %v2649 = vadd.f32 %v2648, %v2522
        %v2650 = vadd.f32 %v2649, %v2523
        %v2651 = vadd.f32 %v2650, %v2524
        %v2652 = vadd.f32 %v2651, %v2525
        %v2653 = vadd.f32 %v2652, %v2526
        %v2654 = vadd.f32 %v2653, %v2527
        %v2655 = vadd.f32 %v2654, %v2528
        %v2656 = vadd.f32 %v2655, %v2529
        %v2657 = vadd.f32 %v2656, %v2530
        %v2658 = vadd.f32 %v2657, %v2531
        %v2659 = vadd.f32 %v2658, %v2532
        %v2660 = vadd.f32 %v2659, %v2533
        %v2661 = vadd.f32 %v2660, %v2534
        %v2662 = vadd.f32 %v2661, %v2535
        %v2663 = vadd.f32 %v2662, %v2536
        %v2664 = vadd.f32 %v2663, %v2537
        %v2665 = vadd.f32 %v2664, %v2538
        %v2666 = vadd.f32 %v2665, %v2539
        %v2667 = vadd.f32 %v2666, %v2540
        %v2668 = vadd.f32 %v2667, %v2541
        %v2669 = vadd.f32 %v2668, %v2542
        %v2670 = vadd.f32 %v2669, %v2543
        %v2671 = vadd.f32 %v2670, %v2544
        %v2672 = vadd.f32 %v2671, %v2545
        %v2673 = vadd.f32 %v2672, %v2546
        %v2674 = vadd.f32 %v2673, %v2547
        %v2675 = vadd.f32 %v2674, %v2548
        %v2676 = vadd.f32 %v2675, %v2549
        %v2677 = vadd.f32 %v2676, %v2550
        %v2678 = vadd.f32 %v2677, %v2551
        %v2679 = vadd.f32 %v2678, %v2552
        %v2680 = vadd.f32 %v2679, %v2553
        %v2681 = vadd.f32 %v2680, %v2554
        %v2682 = vadd.f32 %v2681, %v2555
        %v2683 = vadd.f32 %v2682, %v2556
        %v2684 = vadd.f32 %v2683, %v2557
        %v2685 = vadd.f32 %v2684, %v2558
        %v2686 = vadd.f32 %v2685, %v2559
        %v2687 = vadd.f32 %v2686, %v2560
        %v2688 = vrot.slane %v2687, 4
        %v2689 = vadd.f32 %v2687, %v2688
        %v2690 = vrot.slane %v2689, 2
        %v2691 = vadd.f32 %v2689, %v2690
        %v2692 = vrot.slane %v2691, 1
        %v2693 = vadd.f32 %v2691, %v2692
        %vm2694 = vcmask 1040384
        %v2695 = vsel %vm2694, %v2432, %v2693
        %2696 = vst [vmem:[%s215] sm:$0x3] %v2695
        %s2697 = sand.u32 %s80, 1
        %s2698 = scalar_lea.sflag [#allocation4], %s2697
        %s2699 = sand.u32 %s80, 1
        %s2700 = smul.addr %s2699, 512
        %s2701 = scalar_lea.vmem [#allocation7], %s2700
        %s2702 = sand.u32 %s106, 1
        %s2703 = scalar_lea.sflag [#allocation9], %s2702
        %s2704 = sand.u32 %s106, 1
        %s2705 = smul.addr %s2704, 2
        %s2706 = scalar_lea.vmem [#allocation8], %s2705
        // Predicated region
        $region37: #{tpu_custom_call.1} parent=27 // pred_check
          %p2707 = pneg %p90
        $region38: #{tpu_custom_call.1} parent=27 // pred_check_branch
          %2709 = sbr.rel (%p2707) target = $region40
        $region39: #{tpu_custom_call.1} parent=27 // pred_region
          %s2710 = smul.u32 128, %s25
          %s2712 = ssub.s32 8192, 8192
          %2713 = vsyncadd %s2698, %s2712
          %s2714 = smul.addr %s2710, 64
          %s2715 = scalar_lea.hbm %s2, %s2714
          %s2716 = sshll.u32 %s2701, 4
          %s2717 = int_to_ptr.vmem [resolvable:$true] %s2716
          %2722 = dma.vmem_to_hbm [thread:$0]  %s2717, 8192, %s2715, %s2698, 64, 64, 4
        $region40: #{tpu_custom_call.1} parent=27 // pred_fallthru
          _
        // Predicated region
        $region41: #{tpu_custom_call.1} parent=27 // pred_check
          %p2723 = pneg %p116
        $region42: #{tpu_custom_call.1} parent=27 // pred_check_branch
          %2725 = sbr.rel (%p2723) target = $region44
        $region43: #{tpu_custom_call.1} parent=27 // pred_region
          %s2727 = ssub.s32 32, 32
          %2728 = vsyncadd %s2703, %s2727
          %s2729 = smul.addr %s25, 32
          %s2730 = scalar_lea.hbm %s3, %s2729
          %s2732 = sshll.u32 %s2706, 4
          %s2733 = int_to_ptr.vmem [resolvable:$true] %s2732
          %2735 = dma.vmem_to_hbm [thread:$0]  %s2733, 32, %s2730, %s2703
        $region44: #{tpu_custom_call.1} parent=27 // pred_fallthru
          _
      $region28: #{tpu_custom_call.1} parent=5 // pred_fallthru
        _
      %p2736 = scmp.le.s32.totalorder 2, %s20
      // Predicated region
      $region45: #{tpu_custom_call.1} parent=5 // pred_check
        %p2737 = pneg %p2736
      $region46: #{tpu_custom_call.1} parent=5 // pred_check_branch
        %2739 = sbr.rel (%p2737) target = $region48
      $region47: #{tpu_custom_call.1} parent=5 // pred_region
        %s2740 = ssub.s32 %s20, 2
        // Predicated region
        $region49: #{tpu_custom_call.1} parent=47 // pred_check
          %p2741 = pneg %p96
        $region50: #{tpu_custom_call.1} parent=47 // pred_check_branch
          %2743 = sbr.rel (%p2741) target = $region52
        $region51: #{tpu_custom_call.1} parent=47 // pred_region
          %s2744 = sand.u32 %s81, 1
          %s2745 = scalar_lea.sflag [#allocation4], %s2744
          %s2746 = sand.u32 %s81, 1
          %s2747 = smul.addr %s2746, 512
          %s2748 = scalar_lea.vmem [#allocation7], %s2747
          %2749 = dma.done %s2745, 8192
        $region52: #{tpu_custom_call.1} parent=47 // pred_fallthru
          _
        // Predicated region
        $region53: #{tpu_custom_call.1} parent=47 // pred_check
          %p2750 = pneg %p122
        $region54: #{tpu_custom_call.1} parent=47 // pred_check_branch
          %2752 = sbr.rel (%p2750) target = $region56
        $region55: #{tpu_custom_call.1} parent=47 // pred_region
          %s2753 = sand.u32 %s107, 1
          %s2754 = scalar_lea.sflag [#allocation9], %s2753
          %s2755 = sand.u32 %s107, 1
          %s2756 = smul.addr %s2755, 2
          %s2757 = scalar_lea.vmem [#allocation8], %s2756
          %2758 = dma.done %s2754, 32
        $region56: #{tpu_custom_call.1} parent=47 // pred_fallthru
          _
      $region48: #{tpu_custom_call.1} parent=5 // pred_fallthru
        _
    $region6: #{tpu_custom_call.1} parent=1 // loop_footer
      %s24 = sadd.s32 1, %s20
    $region7: #{tpu_custom_call.1} parent=1 // loop_footer_branch
      %19 = sbr.rel target = $region3
    $region8: #{tpu_custom_call.1} parent=1 // loop_exit
      _
    %2759 = vsyncpa [#allocation3], 1
    %s2760 = scalar_lea.sflag [#allocation3], 1
    %2761 = vsyncpa %s2760, 1
    %2762 = vsyncpa [#allocation6], 1
    %2763 = vsyncpa [#allocation4], 1
    %s2764 = scalar_lea.sflag [#allocation4], 1
    %2765 = vsyncpa %s2764, 1
    %2766 = vsyncpa [#allocation9], 1
    %s2767 = scalar_lea.sflag [#allocation9], 1
    %2768 = vsyncpa %s2767, 1

</llo_original>
